<compile_context>
chip_gen: v6e
topology: v6e:2x2x1
jax: 0.10.0
libtpu: 0.0.40
codegen_flags: <defaults>
</compile_context>

<pallas_src>
import functools
import math

import jax
import jax.numpy as jnp
from jax import lax
from jax.experimental import pallas as pl
from jax.experimental.pallas import tpu as pltpu


def _round_up(x, m):
    return ((x + m - 1) // m) * m


def _apply_act(y, act):
    if act is None:
        return y
    if act == 'relu':
        return jnp.maximum(y, 0.0)
    if act == 'tanh':
        return jnp.tanh(y)
    if act == 'sigmoid':
        return jax.nn.sigmoid(y)
    raise ValueError(f"unknown activation {act}")


# Tile targets: 2*(tm*tk + tk*tn)*2B (bf16, double-buffered) + (tm*tn)*4B acc stays well
# under the v7x 32 MiB scoped / 64 MiB physical VMEM budget (and v5e's 16 MiB default).
_MM_TM, _MM_TN, _MM_TK = 256, 512, 512
_GR_TM, _GR_TK = 256, 512
_SCORE_TN = 1024
_VMEM_LIMIT = 32 * 1024 * 1024
_JNP_FALLBACK_FLOPS = 16384   # below this a dedicated pallas_call is pure launch overhead


# ---------------------------------------------------------------------------
# Generic tiled matmul with fused bias + activation epilogue
# ---------------------------------------------------------------------------
def _mm_kernel(a_ref, b_ref, bias_ref, o_ref, acc_ref, *, act):
    @pl.when(pl.program_id(2) == 0)
    def _():
        acc_ref[...] = jnp.zeros_like(acc_ref)

    acc_ref[...] += jnp.dot(a_ref[...], b_ref[...],
                            preferred_element_type=jnp.float32)

    @pl.when(pl.program_id(2) == pl.num_programs(2) - 1)
    def _():
        o_ref[...] = _apply_act(acc_ref[...] + bias_ref[...], act).astype(o_ref.dtype)


def pallas_matmul(a, b, bias=None, act=None):
    """(M,K) @ (K,N) [+ bias] [-> act], bf16 MXU operands, f32 accumulation."""
    a = jnp.asarray(a, jnp.float32)
    b = jnp.asarray(b, jnp.float32)
    M, K = a.shape
    N = b.shape[1]

    # Tiny matmuls (single-row hs/glu2, small-batch heads): let XLA fuse them.
    if M < 8 or (M * K * N) < _JNP_FALLBACK_FLOPS:
        y = jnp.dot(a, b, preferred_element_type=jnp.float32)
        if bias is not None:
            y = y + jnp.asarray(bias, jnp.float32)
        return _apply_act(y, act)

    # Full-extent blocks for small dims (no padding); tiled + padded for large dims.
    tm = M if M <= _MM_TM else _MM_TM
    tn = N if N <= _MM_TN else _MM_TN
    tk = K if K <= _MM_TK else _MM_TK
    Mp, Np, Kp = _round_up(M, tm), _round_up(N, tn), _round_up(K, tk)

    a16 = a.astype(jnp.bfloat16)
    b16 = b.astype(jnp.bfloat16)
    if (Mp, Kp) != (M, K):
        a16 = jnp.pad(a16, ((0, Mp - M), (0, Kp - K)))
    if (Kp, Np) != (K, N):
        b16 = jnp.pad(b16, ((0, Kp - K), (0, Np - N)))
    if bias is None:
        bias_arr = jnp.zeros((1, Np), jnp.float32)
    else:
        bias_arr = jnp.asarray(bias, jnp.float32).reshape(1, N)
        if Np != N:
            bias_arr = jnp.pad(bias_arr, ((0, 0), (0, Np - N)))

    out = pl.pallas_call(
        functools.partial(_mm_kernel, act=act),
        out_shape=jax.ShapeDtypeStruct((Mp, Np), jnp.float32),
        grid=(Mp // tm, Np // tn, Kp // tk),
        in_specs=[pl.BlockSpec((tm, tk), lambda i, j, k: (i, k)),
                  pl.BlockSpec((tk, tn), lambda i, j, k: (k, j)),
                  pl.BlockSpec((1, tn), lambda i, j, k: (0, j))],
        out_specs=pl.BlockSpec((tm, tn), lambda i, j, k: (i, j)),
        scratch_shapes=[pltpu.VMEM((tm, tn), jnp.float32)],
        compiler_params=pltpu.CompilerParams(
            dimension_semantics=("parallel", "parallel", "arbitrary"),
            vmem_limit_bytes=_VMEM_LIMIT),
    )(a16, b16, bias_arr)
    if (Mp, Np) != (M, N):
        out = out[:M, :N]
    return out


def pallas_linear(x, w, b=None, act=None):
    shp = x.shape
    y = pallas_matmul(x.reshape(-1, shp[-1]), w, bias=b, act=act)
    return y.reshape(shp[:-1] + (w.shape[1],))


# ---------------------------------------------------------------------------
# Fused multi-graph propagation:  out[g] = graphs[g] @ x   for all g in one launch
# ---------------------------------------------------------------------------
def _graph_mm_kernel(g_ref, x_ref, o_ref, acc_ref):
    @pl.when(pl.program_id(2) == 0)
    def _():
        acc_ref[...] = jnp.zeros_like(acc_ref)

    acc_ref[...] += jnp.dot(g_ref[...], x_ref[...],
                            preferred_element_type=jnp.float32)

    @pl.when(pl.program_id(2) == pl.num_programs(2) - 1)
    def _():
        o_ref[...] = acc_ref[...]


def multi_graph_matmul(graphs, x):
    """graphs: (G, N, N) stacked adjacency mats, x: (N, E) -> (G, N, E) in f32."""
    G, N, _ = graphs.shape
    E = x.shape[1]
    if N <= _GR_TK:                       # whole graph per step, no padding
        tm = tk = N
        Npad = N
    else:
        tm, tk = _GR_TM, _GR_TK
        Npad = _round_up(N, _GR_TK)

    g16 = graphs.astype(jnp.bfloat16)
    x16 = x.astype(jnp.bfloat16)
    if Npad != N:
        g16 = jnp.pad(g16, ((0, 0), (0, Npad - N), (0, Npad - N)))
        x16 = jnp.pad(x16, ((0, Npad - N), (0, 0)))

    out = pl.pallas_call(
        _graph_mm_kernel,
        out_shape=jax.ShapeDtypeStruct((G, Npad, E), jnp.float32),
        grid=(G, Npad // tm, Npad // tk),
        in_specs=[pl.BlockSpec((None, tm, tk), lambda g, m, k: (g, m, k)),
                  pl.BlockSpec((tk, E), lambda g, m, k: (k, 0))],
        out_specs=pl.BlockSpec((None, tm, E), lambda g, m, k: (g, m, 0)),
        scratch_shapes=[pltpu.VMEM((tm, E), jnp.float32)],
        compiler_params=pltpu.CompilerParams(
            dimension_semantics=("parallel", "parallel", "arbitrary"),
            vmem_limit_bytes=_VMEM_LIMIT),
    )(g16, x16)
    if Npad != N:
        out = out[:, :N, :]
    return out


# ---------------------------------------------------------------------------
# Fused sigmoid gating (positive / negative embedding mix), tiled over rows
# ---------------------------------------------------------------------------
def _gate_kernel(sc_ref, iin_ref, idb_ref, wseq_ref, win_ref, wid_ref,
                 pos_ref, neg_ref):
    sc, iin, idb = sc_ref[...], iin_ref[...], idb_ref[...]
    id_score = jnp.sum(idb * wid_ref[...], axis=-1, keepdims=True)
    s1 = jax.nn.sigmoid(jnp.sum(sc * wseq_ref[...], axis=-1, keepdims=True) + id_score)
    s2 = jax.nn.sigmoid(jnp.sum(iin * win_ref[...], axis=-1, keepdims=True) + id_score)
    pos_ref[...] = s1 * sc + (1.0 - s1) * idb
    neg_ref[...] = s2 * iin + (1.0 - s2) * idb


def pallas_gate(sc, iin, idb, w_seq, w_in, w_id):
    """positive_emb / negative_emb construction over rows = B*L (f32 VPU work)."""
    M, E = sc.shape
    tr = M if M <= 512 else 256
    Mp = _round_up(M, tr)

    def padrows(v):
        return v if Mp == M else jnp.pad(v, ((0, Mp - M), (0, 0)))

    def wrow(v):
        return jnp.asarray(v, jnp.float32).reshape(1, E)

    data_spec = pl.BlockSpec((tr, E), lambda i: (i, 0))
    w_spec = pl.BlockSpec((1, E), lambda i: (0, 0))
    pos, neg = pl.pallas_call(
        _gate_kernel,
        out_shape=(jax.ShapeDtypeStruct((Mp, E), jnp.float32),
                   jax.ShapeDtypeStruct((Mp, E), jnp.float32)),
        grid=(Mp // tr,),
        in_specs=[data_spec, data_spec, data_spec, w_spec, w_spec, w_spec],
        out_specs=(data_spec, data_spec),
        compiler_params=pltpu.CompilerParams(dimension_semantics=("parallel",)),
    )(padrows(sc), padrows(iin), padrows(idb), wrow(w_seq), wrow(w_in), wrow(w_id))
    if Mp != M:
        pos, neg = pos[:M], neg[:M]
    return pos, neg


# ---------------------------------------------------------------------------
# Final fused scoring:  p @ emb^T - LeakyReLU(n @ emb^T), tiled over item vocab
# ---------------------------------------------------------------------------
def _score_kernel(p_ref, n_ref, emb_ref, o_ref, *, alpha):
    dn = (((1,), (1,)), ((), ()))          # contract on E; no emb transpose needed
    ps = lax.dot_general(p_ref[...], emb_ref[...], dn,
                         preferred_element_type=jnp.float32)
    ns = lax.dot_general(n_ref[...], emb_ref[...], dn,
                         preferred_element_type=jnp.float32)
    o_ref[...] = ps - jnp.where(ns >= 0.0, ns, alpha * ns)


def pallas_final_score(p, n, emb, alpha):
    B, E = p.shape
    Ni = emb.shape[0]
    tni = Ni if Ni <= 2 * _SCORE_TN else _SCORE_TN
    Nip = _round_up(Ni, tni)
    p16 = jnp.asarray(p, jnp.float32).astype(jnp.bfloat16)
    n16 = jnp.asarray(n, jnp.float32).astype(jnp.bfloat16)
    emb16 = jnp.asarray(emb, jnp.float32).astype(jnp.bfloat16)
    if Nip != Ni:
        emb16 = jnp.pad(emb16, ((0, Nip - Ni), (0, 0)))
    # TODO(synk): also tile the batch axis if B grows beyond a few hundred rows.
    out = pl.pallas_call(
        functools.partial(_score_kernel, alpha=float(alpha)),
        out_shape=jax.ShapeDtypeStruct((B, Nip), jnp.float32),
        grid=(Nip // tni,),
        in_specs=[pl.BlockSpec((B, E), lambda j: (0, 0)),
                  pl.BlockSpec((B, E), lambda j: (0, 0)),
                  pl.BlockSpec((tni, E), lambda j: (j, 0))],
        out_specs=pl.BlockSpec((B, tni), lambda j: (0, j)),
        compiler_params=pltpu.CompilerParams(
            dimension_semantics=("parallel",),
            vmem_limit_bytes=_VMEM_LIMIT),
    )(p16, n16, emb16)
    if Nip != Ni:
        out = out[:, :Ni]
    return out


# ---------------------------------------------------------------------------
# Model pieces (JAX glue orchestrating the Pallas kernels)
# ---------------------------------------------------------------------------
def seq_ggnn_post(x, in_n, out_n, p, E):
    inv_sqrt = 1.0 / math.sqrt(E)
    h1 = pallas_matmul(x * in_n, p['W1_w'], bias=p['W1_b'], act='relu')   # fused bias+relu
    h2 = pallas_matmul(x * out_n, p['W2_w'], bias=p['W2_b'], act='relu')
    in_score = jnp.sum(h1, axis=1) * inv_sqrt
    out_score = jnp.sum(h2, axis=1) * inv_sqrt
    score = jax.nn.softmax(jnp.stack([in_score, out_score], axis=1), axis=1)
    neighbor = in_n * score[:, 0:1] + out_n * score[:, 1:2]
    # Conv2d(1,1,(1,2)) on stack((x, neighbor), dim=2) -> w0*x + w1*neighbor + b
    return p['conv_w'][0] * x + p['conv_w'][1] * neighbor + p['conv_b']


def attn_readout(feat, last_nodes, mask, p):
    # BatchNorm1d(session_len) in training mode: stats over (batch, embedding) per position.
    mean = jnp.mean(feat, axis=(0, 2), keepdims=True)
    var = jnp.mean((feat - mean) ** 2, axis=(0, 2), keepdims=True)
    feat = (feat - mean) / jnp.sqrt(var + 1e-5)
    feat = feat * p['bn_gamma'][None, :, None] + p['bn_beta'][None, :, None]
    feat = feat * mask
    feat = feat * mask                                        # feat_drop(p=0) is identity
    feat_u = pallas_linear(feat, p['fc_u_w']) * mask
    feat_v = pallas_matmul(last_nodes, p['fc_v_w'], bias=p['fc_v_b'])   # small B -> jnp fallback
    # lane-width-1 projection (E -> 1): keep in XLA, a dedicated kernel would be pure overhead
    e = jax.nn.sigmoid(feat_u + feat_v[:, None, :]) @ p['fc_e_w']       # (B, L, 1)
    e = e + (mask - 1.0) * 1e9          # safe finite mask value (reference used 2e32)
    beta = jax.nn.softmax(e, axis=1)
    rst = jnp.sum(feat * beta * mask, axis=1)
    # PReLU(E)
    return jnp.where(rst >= 0, rst, p['prelu_w'][None, :] * rst)


def session_repr_with_position(target, hidden, mask, p):
    B, L, E = hidden.shape
    pos_emb = jnp.flip(p['pos_embedding'][1:L + 1], axis=0)
    pos_emb_b = jnp.broadcast_to(pos_emb[None], (B, L, E))
    target_pos = p['pos_embedding'][0]
    # single-row matmuls stay in XLA (launch overhead would dominate)
    hs = jnp.tanh(jnp.concatenate([target_pos, target]) @ p['w_1'])        # (E,)
    glu2_hs = hs @ p['glu2_w']                                             # (E,)
    nh_in = jnp.concatenate([pos_emb_b, hidden], axis=-1).reshape(B * L, 2 * E)
    nh = pallas_matmul(nh_in, p['w_1'], act='tanh')                        # fused tanh
    # glu2(hs) is row-constant -> fold into the glu1 bias, fuse the sigmoid epilogue
    nh2 = pallas_matmul(nh, p['glu1_w'], bias=p['glu1_b'] + glu2_hs, act='sigmoid')
    beta = (nh2 @ p['w_2']).reshape(B, L, 1) * mask                        # lane-1 proj in XLA
    return jnp.sum(beta * hidden, axis=1)


def session_repr_without_position(id_emb, hidden, mask, p):
    short = id_emb[:, -1, :]
    relation_short = hidden[:, -1, :]
    long_term = attn_readout(hidden, relation_short, mask, p)
    fused = jnp.concatenate([long_term, short], axis=-1)
    return pallas_matmul(fused, p['mlp_n_ls_w'], bias=p['mlp_n_ls_b'])


def mrgsr_forward(params, graphs_stacked, items, mask, *, alpha=0.0):
    B, L = items.shape
    E = params['pos_embedding'].shape[1]
    mask = mask[..., None].astype(jnp.float32)            # (B, L, 1)

    # TODO(synk): nn.Embedding(max_norm=1) renormalizes rows on access in PyTorch; not replicated.
    item_emb_full = params['item_embedding']               # (item_num+2, E)
    item_embedding = item_emb_full[:-1]                    # (item_num+1, E)

    # One fused, tiled Pallas launch for every graph @ x propagation
    # (graphs_stacked = [seq_in, seq_out, co_in, in_in+in_out], built once at setup).
    neigh = multi_graph_matmul(graphs_stacked, item_embedding)   # (4, n, E)
    seq_in_n, seq_out_n, co_n, in_n = neigh[0], neigh[1], neigh[2], neigh[3]

    seq_emb = seq_ggnn_post(item_embedding, seq_in_n, seq_out_n, params['seq_gnn'], E)
    # CoGGNN conv fold: stack order is (neighbor, x)
    co_emb = (params['co_gnn']['conv_w'][0] * co_n
              + params['co_gnn']['conv_w'][1] * item_embedding
              + params['co_gnn']['conv_b'])
    # InGGNN: mean of (x, g_in@x + g_out@x)
    in_emb = 0.5 * (item_embedding + in_n)

    id_emb = item_embedding[items] * mask
    item_seq = seq_emb[items] * mask
    item_co = co_emb[items] * mask
    item_in = in_emb[items] * mask
    target_item = item_emb_full[-1]

    sc = (item_seq + item_co).reshape(B * L, E)
    pos_flat, neg_flat = pallas_gate(sc,
                                     item_in.reshape(B * L, E),
                                     id_emb.reshape(B * L, E),
                                     params['W_seq'], params['W_in'], params['W_id'])
    positive_emb = pos_flat.reshape(B, L, E)
    negative_emb = neg_flat.reshape(B, L, E)

    pos_repr = session_repr_with_position(target_item, positive_emb, mask, params)
    neg_repr = session_repr_without_position(id_emb, negative_emb, mask, params)

    return pallas_final_score(pos_repr, neg_repr, item_emb_full[:-2], alpha)


# ---------------------------------------------------------------------------
# Deterministic parameter / graph construction (uniform(-1/sqrt(E), 1/sqrt(E)))
# ---------------------------------------------------------------------------
def init_params(key, item_num, E, L):
    stdv = 1.0 / math.sqrt(E)
    keys = iter(jax.random.split(key, 40))

    def u(shape):
        return jax.random.uniform(next(keys), shape, jnp.float32, -stdv, stdv)

    params = dict(
        item_embedding=u((item_num + 2, E)),
        pos_embedding=u((500, E)),
        w_1=u((2 * E, E)),
        w_2=u((E, 1)),
        glu1_w=u((E, E)), glu1_b=u((E,)),
        glu2_w=u((E, E)),
        W_seq=u((E,)), W_in=u((E,)), W_id=u((E,)),
        bn_gamma=u((L,)), bn_beta=u((L,)),
        fc_u_w=u((E, E)),
        fc_v_w=u((E, E)), fc_v_b=u((E,)),
        fc_e_w=u((E, 1)),
        prelu_w=u((E,)),
        mlp_n_ls_w=u((2 * E, E)), mlp_n_ls_b=u((E,)),
        # TODO(synk): PyTorch re-instantiates SeqGGNN/CoGGNN/InGGNN (fresh random params)
        # on every forward call; here they are fixed deterministically.
        seq_gnn=dict(conv_w=u((2,)), conv_b=u(()),
                     W1_w=u((E, E)), W1_b=u((E,)),
                     W2_w=u((E, E)), W2_b=u((E,))),
        co_gnn=dict(conv_w=u((2,)), conv_b=u(())),
    )
    return params


def init_graphs(key, n_nodes):
    ks = jax.random.split(key, 5)
    names = ['seq_in', 'seq_out', 'co_in', 'in_in', 'in_out']
    return {name: jax.random.uniform(k, (n_nodes, n_nodes), jnp.float32,
                                     0.0, 1.0 / n_nodes)
            for name, k in zip(names, ks)}


def stack_graphs(graphs):
    """Setup-time preprocessing: fold in_in+in_out (linearity of mm) and stack all adjacency
    matrices so GNN propagation runs as one fused Pallas matmul with a 'graph' grid axis."""
    return jnp.stack([graphs['seq_in'], graphs['seq_out'], graphs['co_in'],
                      graphs['in_in'] + graphs['in_out']], axis=0)


# ---------------------------------------------------------------------------
if __name__ == "__main__":
    B, L, E, item_num = 2, 8, 32, 40   # session_len = L
    key = jax.random.PRNGKey(0)
    k_par, k_gr, k_items = jax.random.split(key, 3)

    params = init_params(k_par, item_num, E, L)
    graphs = init_graphs(k_gr, item_num + 1)
    graphs_stacked = stack_graphs(graphs)    # (4, n_nodes, n_nodes), built once at setup

    lengths = jnp.array([6, 4], dtype=jnp.int32)
    mask = (jnp.arange(L)[None, :] < lengths[:, None]).astype(jnp.float32)  # (B, L)
    raw_items = jax.random.randint(k_items, (B, L), 0, item_num, dtype=jnp.int32)
    items = jnp.where(mask > 0, raw_items, item_num)   # padding idx = item_num

    fwd = jax.jit(functools.partial(mrgsr_forward, alpha=0.0))
    score = fwd(params, graphs_stacked, items, mask)
    jax.block_until_ready(score)

    assert score.shape == (B, item_num), score.shape
    assert bool(jnp.all(jnp.isfinite(score)))
    print("KERNEL_OK")
</pallas_src>

<mosaic_0001>
module attributes {stable_mosaic.version = 11 : i64} {
  func.func @_graph_mm_kernel(%arg0: i32, %arg1: i32, %arg2: i32, %arg3: memref<1x41x41xbf16, #tpu.memory_space<vmem>>, %arg4: memref<41x32xbf16, #tpu.memory_space<vmem>>, %arg5: memref<1x41x32xf32, #tpu.memory_space<vmem>>, %arg6: memref<41x32xf32, #tpu.memory_space<vmem>>) attributes {dimension_semantics = [#tpu.dimension_semantics<parallel>, #tpu.dimension_semantics<parallel>, #tpu.dimension_semantics<arbitrary>], iteration_bounds = array<i64: 4, 1, 1>, scalar_prefetch = 0 : i64, scratch_operands = 1 : i64, tpu.core_type = #tpu.core_type<tc>, window_params = [{transform_indices = @transform_0, window_bounds = array<i64: 1, 41, 41>}, {transform_indices = @transform_1, window_bounds = array<i64: 41, 32>}, {transform_indices = @transform_2, window_bounds = array<i64: 1, 41, 32>}]} {
    %c0_i32 = arith.constant 0 : i32
    %0 = arith.cmpi eq, %arg2, %c0_i32 : i32
    %1 = arith.extui %0 : i1 to i32
    %c0_i32_0 = arith.constant 0 : i32
    %2 = arith.cmpi ne, %1, %c0_i32_0 : i32
    scf.if %2 {
      %cst_11 = arith.constant 0.000000e+00 : f32
      %13 = vector.broadcast %cst_11 : f32 to vector<41x32xf32>
      %c0_12 = arith.constant 0 : index
      %c0_13 = arith.constant 0 : index
      %14 = vector.load %arg6[%c0_12, %c0_13] : memref<41x32xf32, #tpu.memory_space<vmem>>, vector<41x32xf32>
      tpu.vector_store %arg6[%c0_12, %c0_13], %13 {strides = array<i32>} : memref<41x32xf32, #tpu.memory_space<vmem>>, vector<41x32xf32>,
    } else {
    }
    %c0 = arith.constant 0 : index
    %c0_1 = arith.constant 0 : index
    %3 = vector.load %arg6[%c0, %c0_1] : memref<41x32xf32, #tpu.memory_space<vmem>>, vector<41x32xf32>
    %c0_2 = arith.constant 0 : index
    %c0_3 = arith.constant 0 : index
    %c0_4 = arith.constant 0 : index
    %4 = vector.load %arg3[%c0_2, %c0_3, %c0_4] : memref<1x41x41xbf16, #tpu.memory_space<vmem>>, vector<1x41x41xbf16>
    %5 = vector.shape_cast %4 : vector<1x41x41xbf16> to vector<41x41xbf16>
    %c0_5 = arith.constant 0 : index
    %c0_6 = arith.constant 0 : index
    %6 = vector.load %arg4[%c0_5, %c0_6] : memref<41x32xbf16, #tpu.memory_space<vmem>>, vector<41x32xbf16>
    %cst = arith.constant dense<0.000000e+00> : vector<41x32xf32>
    %7 = tpu.matmul %5, %6, %cst {dimension_numbers = #tpu.dot_dimension_numbers<[1], [0], [0], [1], [0, 0, 1, 1], [], []>} : vector<41x41xbf16>, vector<41x32xbf16>, vector<41x32xf32> -> vector<41x32xf32>
    %8 = arith.addf %3, %7 : vector<41x32xf32>
    %c0_7 = arith.constant 0 : index
    %c0_8 = arith.constant 0 : index
    %9 = vector.load %arg6[%c0_7, %c0_8] : memref<41x32xf32, #tpu.memory_space<vmem>>, vector<41x32xf32>
    tpu.vector_store %arg6[%c0_7, %c0_8], %8 {strides = array<i32>} : memref<41x32xf32, #tpu.memory_space<vmem>>, vector<41x32xf32>,
    %c0_i32_9 = arith.constant 0 : i32
    %10 = arith.cmpi eq, %arg2, %c0_i32_9 : i32
    %11 = arith.extui %10 : i1 to i32
    %c0_i32_10 = arith.constant 0 : i32
    %12 = arith.cmpi ne, %11, %c0_i32_10 : i32
    scf.if %12 {
      %c0_11 = arith.constant 0 : index
      %c0_12 = arith.constant 0 : index
      %13 = vector.load %arg6[%c0_11, %c0_12] : memref<41x32xf32, #tpu.memory_space<vmem>>, vector<41x32xf32>
      %c0_13 = arith.constant 0 : index
      %c0_14 = arith.constant 0 : index
      %c0_15 = arith.constant 0 : index
      %14 = vector.load %arg5[%c0_13, %c0_14, %c0_15] : memref<1x41x32xf32, #tpu.memory_space<vmem>>, vector<1x41x32xf32>
      %15 = vector.shape_cast %14 : vector<1x41x32xf32> to vector<41x32xf32>
      %16 = vector.shape_cast %13 : vector<41x32xf32> to vector<1x41x32xf32>
      tpu.vector_store %arg5[%c0_13, %c0_14, %c0_15], %16 {strides = array<i32>} : memref<1x41x32xf32, #tpu.memory_space<vmem>>, vector<1x41x32xf32>,
    } else {
    }
    return
  }
  func.func @transform_0(%arg0: i32, %arg1: i32, %arg2: i32) -> (i32, i32, i32) {
    %c0_i32 = arith.constant 0 : i32
    return %arg0, %arg1, %arg2 : i32, i32, i32
  }
  func.func @transform_1(%arg0: i32, %arg1: i32, %arg2: i32) -> (i32, i32) {
    %c0_i32 = arith.constant 0 : i32
    %c0_i32_0 = arith.constant 0 : i32
    return %arg2, %c0_i32 : i32, i32
  }
  func.func @transform_2(%arg0: i32, %arg1: i32, %arg2: i32) -> (i32, i32, i32) {
    %c0_i32 = arith.constant 0 : i32
    %c0_i32_0 = arith.constant 0 : i32
    return %arg0, %arg1, %c0_i32 : i32, i32, i32
  }
}

module attributes {stable_mosaic.version = 11 : i64} {
  func.func @_mm_kernel(%arg0: i32, %arg1: i32, %arg2: i32, %arg3: memref<41x32xbf16, #tpu.memory_space<vmem>>, %arg4: memref<32x32xbf16, #tpu.memory_space<vmem>>, %arg5: memref<1x32xf32, #tpu.memory_space<vmem>>, %arg6: memref<41x32xf32, #tpu.memory_space<vmem>>, %arg7: memref<41x32xf32, #tpu.memory_space<vmem>>) attributes {dimension_semantics = [#tpu.dimension_semantics<parallel>, #tpu.dimension_semantics<parallel>, #tpu.dimension_semantics<arbitrary>], iteration_bounds = array<i64: 1, 1, 1>, scalar_prefetch = 0 : i64, scratch_operands = 1 : i64, tpu.core_type = #tpu.core_type<tc>, window_params = [{transform_indices = @transform_0, window_bounds = array<i64: 41, 32>}, {transform_indices = @transform_1, window_bounds = array<i64: 32, 32>}, {transform_indices = @transform_2, window_bounds = array<i64: 1, 32>}, {transform_indices = @transform_3, window_bounds = array<i64: 41, 32>}]} {
    %c0_i32 = arith.constant 0 : i32
    %0 = arith.cmpi eq, %arg2, %c0_i32 : i32
    %1 = arith.extui %0 : i1 to i32
    %c0_i32_0 = arith.constant 0 : i32
    %2 = arith.cmpi ne, %1, %c0_i32_0 : i32
    scf.if %2 {
      %cst_10 = arith.constant 0.000000e+00 : f32
      %12 = vector.broadcast %cst_10 : f32 to vector<41x32xf32>
      %c0_11 = arith.constant 0 : index
      %c0_12 = arith.constant 0 : index
      %13 = vector.load %arg7[%c0_11, %c0_12] : memref<41x32xf32, #tpu.memory_space<vmem>>, vector<41x32xf32>
      tpu.vector_store %arg7[%c0_11, %c0_12], %12 {strides = array<i32>} : memref<41x32xf32, #tpu.memory_space<vmem>>, vector<41x32xf32>,
    } else {
    }
    %c0 = arith.constant 0 : index
    %c0_1 = arith.constant 0 : index
    %3 = vector.load %arg7[%c0, %c0_1] : memref<41x32xf32, #tpu.memory_space<vmem>>, vector<41x32xf32>
    %c0_2 = arith.constant 0 : index
    %c0_3 = arith.constant 0 : index
    %4 = vector.load %arg3[%c0_2, %c0_3] : memref<41x32xbf16, #tpu.memory_space<vmem>>, vector<41x32xbf16>
    %c0_4 = arith.constant 0 : index
    %c0_5 = arith.constant 0 : index
    %5 = vector.load %arg4[%c0_4, %c0_5] : memref<32x32xbf16, #tpu.memory_space<vmem>>, vector<32x32xbf16>
    %cst = arith.constant dense<0.000000e+00> : vector<41x32xf32>
    %6 = tpu.matmul %4, %5, %cst {dimension_numbers = #tpu.dot_dimension_numbers<[1], [0], [0], [1], [0, 0, 1, 1], [], []>} : vector<41x32xbf16>, vector<32x32xbf16>, vector<41x32xf32> -> vector<41x32xf32>
    %7 = arith.addf %3, %6 : vector<41x32xf32>
    %c0_6 = arith.constant 0 : index
    %c0_7 = arith.constant 0 : index
    %8 = vector.load %arg7[%c0_6, %c0_7] : memref<41x32xf32, #tpu.memory_space<vmem>>, vector<41x32xf32>
    tpu.vector_store %arg7[%c0_6, %c0_7], %7 {strides = array<i32>} : memref<41x32xf32, #tpu.memory_space<vmem>>, vector<41x32xf32>,
    %c0_i32_8 = arith.constant 0 : i32
    %9 = arith.cmpi eq, %arg2, %c0_i32_8 : i32
    %10 = arith.extui %9 : i1 to i32
    %c0_i32_9 = arith.constant 0 : i32
    %11 = arith.cmpi ne, %10, %c0_i32_9 : i32
    scf.if %11 {
      %c0_10 = arith.constant 0 : index
      %c0_11 = arith.constant 0 : index
      %12 = vector.load %arg7[%c0_10, %c0_11] : memref<41x32xf32, #tpu.memory_space<vmem>>, vector<41x32xf32>
      %c0_12 = arith.constant 0 : index
      %c0_13 = arith.constant 0 : index
      %13 = vector.load %arg5[%c0_12, %c0_13] : memref<1x32xf32, #tpu.memory_space<vmem>>, vector<1x32xf32>
      %14 = vector.broadcast %13 : vector<1x32xf32> to vector<41x32xf32>
      %15 = arith.addf %12, %14 : vector<41x32xf32>
      %cst_14 = arith.constant 0.000000e+00 : f32
      %16 = vector.broadcast %cst_14 : f32 to vector<41x32xf32>
      %17 = arith.maximumf %15, %16 : vector<41x32xf32>
      %c0_15 = arith.constant 0 : index
      %c0_16 = arith.constant 0 : index
      %18 = vector.load %arg6[%c0_15, %c0_16] : memref<41x32xf32, #tpu.memory_space<vmem>>, vector<41x32xf32>
      tpu.vector_store %arg6[%c0_15, %c0_16], %17 {strides = array<i32>} : memref<41x32xf32, #tpu.memory_space<vmem>>, vector<41x32xf32>,
    } else {
    }
    return
  }
  func.func @transform_0(%arg0: i32, %arg1: i32, %arg2: i32) -> (i32, i32) {
    %c0_i32 = arith.constant 0 : i32
    return %arg0, %arg2 : i32, i32
  }
  func.func @transform_1(%arg0: i32, %arg1: i32, %arg2: i32) -> (i32, i32) {
    %c0_i32 = arith.constant 0 : i32
    return %arg2, %arg1 : i32, i32
  }
  func.func @transform_2(%arg0: i32, %arg1: i32, %arg2: i32) -> (i32, i32) {
    %c0_i32 = arith.constant 0 : i32
    %c0_i32_0 = arith.constant 0 : i32
    return %c0_i32, %arg1 : i32, i32
  }
  func.func @transform_3(%arg0: i32, %arg1: i32, %arg2: i32) -> (i32, i32) {
    %c0_i32 = arith.constant 0 : i32
    return %arg0, %arg1 : i32, i32
  }
}

module attributes {stable_mosaic.version = 11 : i64} {
  func.func @_gate_kernel(%arg0: i32, %arg1: memref<16x32xf32, #tpu.memory_space<vmem>>, %arg2: memref<16x32xf32, #tpu.memory_space<vmem>>, %arg3: memref<16x32xf32, #tpu.memory_space<vmem>>, %arg4: memref<1x32xf32, #tpu.memory_space<vmem>>, %arg5: memref<1x32xf32, #tpu.memory_space<vmem>>, %arg6: memref<1x32xf32, #tpu.memory_space<vmem>>, %arg7: memref<16x32xf32, #tpu.memory_space<vmem>>, %arg8: memref<16x32xf32, #tpu.memory_space<vmem>>) attributes {dimension_semantics = [#tpu.dimension_semantics<parallel>], iteration_bounds = array<i64: 1>, scalar_prefetch = 0 : i64, scratch_operands = 0 : i64, tpu.core_type = #tpu.core_type<tc>, window_params = [{transform_indices = @transform_0, window_bounds = array<i64: 16, 32>}, {transform_indices = @transform_1, window_bounds = array<i64: 16, 32>}, {transform_indices = @transform_2, window_bounds = array<i64: 16, 32>}, {pipeline_mode = #tpu.pipeline_mode<synchronous>, transform_indices = @transform_3, window_bounds = array<i64: 1, 32>}, {pipeline_mode = #tpu.pipeline_mode<synchronous>, transform_indices = @transform_4, window_bounds = array<i64: 1, 32>}, {pipeline_mode = #tpu.pipeline_mode<synchronous>, transform_indices = @transform_5, window_bounds = array<i64: 1, 32>}, {transform_indices = @transform_6, window_bounds = array<i64: 16, 32>}, {transform_indices = @transform_7, window_bounds = array<i64: 16, 32>}]} {
    %c0 = arith.constant 0 : index
    %c0_0 = arith.constant 0 : index
    %0 = vector.load %arg1[%c0, %c0_0] : memref<16x32xf32, #tpu.memory_space<vmem>>, vector<16x32xf32>
    %c0_1 = arith.constant 0 : index
    %c0_2 = arith.constant 0 : index
    %1 = vector.load %arg2[%c0_1, %c0_2] : memref<16x32xf32, #tpu.memory_space<vmem>>, vector<16x32xf32>
    %c0_3 = arith.constant 0 : index
    %c0_4 = arith.constant 0 : index
    %2 = vector.load %arg3[%c0_3, %c0_4] : memref<16x32xf32, #tpu.memory_space<vmem>>, vector<16x32xf32>
    %c0_5 = arith.constant 0 : index
    %c0_6 = arith.constant 0 : index
    %3 = vector.load %arg6[%c0_5, %c0_6] : memref<1x32xf32, #tpu.memory_space<vmem>>, vector<1x32xf32>
    %4 = vector.broadcast %3 : vector<1x32xf32> to vector<16x32xf32>
    %5 = arith.mulf %2, %4 : vector<16x32xf32>
    %cst = arith.constant dense<0.000000e+00> : vector<16xf32>
    %6 = vector.multi_reduction <add>, %5, %cst [1] : vector<16x32xf32> to vector<16xf32>
    %7 = vector.shape_cast %6 : vector<16xf32> to vector<16x1xf32>
    %c0_7 = arith.constant 0 : index
    %c0_8 = arith.constant 0 : index
    %8 = vector.load %arg4[%c0_7, %c0_8] : memref<1x32xf32, #tpu.memory_space<vmem>>, vector<1x32xf32>
    %9 = vector.broadcast %8 : vector<1x32xf32> to vector<16x32xf32>
    %10 = arith.mulf %0, %9 : vector<16x32xf32>
    %cst_9 = arith.constant dense<0.000000e+00> : vector<16xf32>
    %11 = vector.multi_reduction <add>, %10, %cst_9 [1] : vector<16x32xf32> to vector<16xf32>
    %12 = vector.shape_cast %11 : vector<16xf32> to vector<16x1xf32>
    %13 = arith.addf %12, %7 : vector<16x1xf32>
    %14 = arith.negf %13 : vector<16x1xf32>
    %15 = math.exp %14 : vector<16x1xf32>
    %cst_10 = arith.constant 1.000000e+00 : f32
    %16 = vector.broadcast %cst_10 : f32 to vector<16x1xf32>
    %17 = arith.addf %16, %15 : vector<16x1xf32>
    %18 = arith.divf %16, %17 : vector<16x1xf32>
    %c0_11 = arith.constant 0 : index
    %c0_12 = arith.constant 0 : index
    %19 = vector.load %arg5[%c0_11, %c0_12] : memref<1x32xf32, #tpu.memory_space<vmem>>, vector<1x32xf32>
    %20 = vector.broadcast %19 : vector<1x32xf32> to vector<16x32xf32>
    %21 = arith.mulf %1, %20 : vector<16x32xf32>
    %cst_13 = arith.constant dense<0.000000e+00> : vector<16xf32>
    %22 = vector.multi_reduction <add>, %21, %cst_13 [1] : vector<16x32xf32> to vector<16xf32>
    %23 = vector.shape_cast %22 : vector<16xf32> to vector<16x1xf32>
    %24 = arith.addf %23, %7 : vector<16x1xf32>
    %25 = arith.negf %24 : vector<16x1xf32>
    %26 = math.exp %25 : vector<16x1xf32>
    %cst_14 = arith.constant 1.000000e+00 : f32
    %27 = vector.broadcast %cst_14 : f32 to vector<16x1xf32>
    %28 = arith.addf %27, %26 : vector<16x1xf32>
    %29 = arith.divf %27, %28 : vector<16x1xf32>
    %30 = vector.broadcast %18 : vector<16x1xf32> to vector<16x32xf32>
    %31 = arith.mulf %30, %0 : vector<16x32xf32>
    %cst_15 = arith.constant 1.000000e+00 : f32
    %32 = vector.broadcast %cst_15 : f32 to vector<16x1xf32>
    %33 = arith.subf %32, %18 : vector<16x1xf32>
    %34 = vector.broadcast %33 : vector<16x1xf32> to vector<16x32xf32>
    %35 = arith.mulf %34, %2 : vector<16x32xf32>
    %36 = arith.addf %31, %35 : vector<16x32xf32>
    %c0_16 = arith.constant 0 : index
    %c0_17 = arith.constant 0 : index
    %37 = vector.load %arg7[%c0_16, %c0_17] : memref<16x32xf32, #tpu.memory_space<vmem>>, vector<16x32xf32>
    tpu.vector_store %arg7[%c0_16, %c0_17], %36 {strides = array<i32>} : memref<16x32xf32, #tpu.memory_space<vmem>>, vector<16x32xf32>,
    %38 = vector.broadcast %29 : vector<16x1xf32> to vector<16x32xf32>
    %39 = arith.mulf %38, %1 : vector<16x32xf32>
    %cst_18 = arith.constant 1.000000e+00 : f32
    %40 = vector.broadcast %cst_18 : f32 to vector<16x1xf32>
    %41 = arith.subf %40, %29 : vector<16x1xf32>
    %42 = vector.broadcast %41 : vector<16x1xf32> to vector<16x32xf32>
    %43 = arith.mulf %42, %2 : vector<16x32xf32>
    %44 = arith.addf %39, %43 : vector<16x32xf32>
    %c0_19 = arith.constant 0 : index
    %c0_20 = arith.constant 0 : index
    %45 = vector.load %arg8[%c0_19, %c0_20] : memref<16x32xf32, #tpu.memory_space<vmem>>, vector<16x32xf32>
    tpu.vector_store %arg8[%c0_19, %c0_20], %44 {strides = array<i32>} : memref<16x32xf32, #tpu.memory_space<vmem>>, vector<16x32xf32>,
    return
  }
  func.func @transform_0(%arg0: i32) -> (i32, i32) {
    %c0_i32 = arith.constant 0 : i32
    %c0_i32_0 = arith.constant 0 : i32
    return %arg0, %c0_i32 : i32, i32
  }
  func.func @transform_1(%arg0: i32) -> (i32, i32) {
    %c0_i32 = arith.constant 0 : i32
    %c0_i32_0 = arith.constant 0 : i32
    return %arg0, %c0_i32 : i32, i32
  }
  func.func @transform_2(%arg0: i32) -> (i32, i32) {
    %c0_i32 = arith.constant 0 : i32
    %c0_i32_0 = arith.constant 0 : i32
    return %arg0, %c0_i32 : i32, i32
  }
  func.func @transform_3(%arg0: i32) -> (i32, i32) {
    %c0_i32 = arith.constant 0 : i32
    %c0_i32_0 = arith.constant 0 : i32
    %c0_i32_1 = arith.constant 0 : i32
    return %c0_i32, %c0_i32_0 : i32, i32
  }
  func.func @transform_4(%arg0: i32) -> (i32, i32) {
    %c0_i32 = arith.constant 0 : i32
    %c0_i32_0 = arith.constant 0 : i32
    %c0_i32_1 = arith.constant 0 : i32
    return %c0_i32, %c0_i32_0 : i32, i32
  }
  func.func @transform_5(%arg0: i32) -> (i32, i32) {
    %c0_i32 = arith.constant 0 : i32
    %c0_i32_0 = arith.constant 0 : i32
    %c0_i32_1 = arith.constant 0 : i32
    return %c0_i32, %c0_i32_0 : i32, i32
  }
  func.func @transform_6(%arg0: i32) -> (i32, i32) {
    %c0_i32 = arith.constant 0 : i32
    %c0_i32_0 = arith.constant 0 : i32
    return %arg0, %c0_i32 : i32, i32
  }
  func.func @transform_7(%arg0: i32) -> (i32, i32) {
    %c0_i32 = arith.constant 0 : i32
    %c0_i32_0 = arith.constant 0 : i32
    return %arg0, %c0_i32 : i32, i32
  }
}

module attributes {stable_mosaic.version = 11 : i64} {
  func.func @_mm_kernel(%arg0: i32, %arg1: i32, %arg2: i32, %arg3: memref<16x32xbf16, #tpu.memory_space<vmem>>, %arg4: memref<32x32xbf16, #tpu.memory_space<vmem>>, %arg5: memref<1x32xf32, #tpu.memory_space<vmem>>, %arg6: memref<16x32xf32, #tpu.memory_space<vmem>>, %arg7: memref<16x32xf32, #tpu.memory_space<vmem>>) attributes {dimension_semantics = [#tpu.dimension_semantics<parallel>, #tpu.dimension_semantics<parallel>, #tpu.dimension_semantics<arbitrary>], iteration_bounds = array<i64: 1, 1, 1>, scalar_prefetch = 0 : i64, scratch_operands = 1 : i64, tpu.core_type = #tpu.core_type<tc>, window_params = [{transform_indices = @transform_0, window_bounds = array<i64: 16, 32>}, {transform_indices = @transform_1, window_bounds = array<i64: 32, 32>}, {transform_indices = @transform_2, window_bounds = array<i64: 1, 32>}, {transform_indices = @transform_3, window_bounds = array<i64: 16, 32>}]} {
    %c0_i32 = arith.constant 0 : i32
    %0 = arith.cmpi eq, %arg2, %c0_i32 : i32
    %1 = arith.extui %0 : i1 to i32
    %c0_i32_0 = arith.constant 0 : i32
    %2 = arith.cmpi ne, %1, %c0_i32_0 : i32
    scf.if %2 {
      %cst_10 = arith.constant 0.000000e+00 : f32
      %12 = vector.broadcast %cst_10 : f32 to vector<16x32xf32>
      %c0_11 = arith.constant 0 : index
      %c0_12 = arith.constant 0 : index
      %13 = vector.load %arg7[%c0_11, %c0_12] : memref<16x32xf32, #tpu.memory_space<vmem>>, vector<16x32xf32>
      tpu.vector_store %arg7[%c0_11, %c0_12], %12 {strides = array<i32>} : memref<16x32xf32, #tpu.memory_space<vmem>>, vector<16x32xf32>,
    } else {
    }
    %c0 = arith.constant 0 : index
    %c0_1 = arith.constant 0 : index
    %3 = vector.load %arg7[%c0, %c0_1] : memref<16x32xf32, #tpu.memory_space<vmem>>, vector<16x32xf32>
    %c0_2 = arith.constant 0 : index
    %c0_3 = arith.constant 0 : index
    %4 = vector.load %arg3[%c0_2, %c0_3] : memref<16x32xbf16, #tpu.memory_space<vmem>>, vector<16x32xbf16>
    %c0_4 = arith.constant 0 : index
    %c0_5 = arith.constant 0 : index
    %5 = vector.load %arg4[%c0_4, %c0_5] : memref<32x32xbf16, #tpu.memory_space<vmem>>, vector<32x32xbf16>
    %cst = arith.constant dense<0.000000e+00> : vector<16x32xf32>
    %6 = tpu.matmul %4, %5, %cst {dimension_numbers = #tpu.dot_dimension_numbers<[1], [0], [0], [1], [0, 0, 1, 1], [], []>} : vector<16x32xbf16>, vector<32x32xbf16>, vector<16x32xf32> -> vector<16x32xf32>
    %7 = arith.addf %3, %6 : vector<16x32xf32>
    %c0_6 = arith.constant 0 : index
    %c0_7 = arith.constant 0 : index
    %8 = vector.load %arg7[%c0_6, %c0_7] : memref<16x32xf32, #tpu.memory_space<vmem>>, vector<16x32xf32>
    tpu.vector_store %arg7[%c0_6, %c0_7], %7 {strides = array<i32>} : memref<16x32xf32, #tpu.memory_space<vmem>>, vector<16x32xf32>,
    %c0_i32_8 = arith.constant 0 : i32
    %9 = arith.cmpi eq, %arg2, %c0_i32_8 : i32
    %10 = arith.extui %9 : i1 to i32
    %c0_i32_9 = arith.constant 0 : i32
    %11 = arith.cmpi ne, %10, %c0_i32_9 : i32
    scf.if %11 {
      %c0_10 = arith.constant 0 : index
      %c0_11 = arith.constant 0 : index
      %12 = vector.load %arg7[%c0_10, %c0_11] : memref<16x32xf32, #tpu.memory_space<vmem>>, vector<16x32xf32>
      %c0_12 = arith.constant 0 : index
      %c0_13 = arith.constant 0 : index
      %13 = vector.load %arg5[%c0_12, %c0_13] : memref<1x32xf32, #tpu.memory_space<vmem>>, vector<1x32xf32>
      %14 = vector.broadcast %13 : vector<1x32xf32> to vector<16x32xf32>
      %15 = arith.addf %12, %14 : vector<16x32xf32>
      %c0_14 = arith.constant 0 : index
      %c0_15 = arith.constant 0 : index
      %16 = vector.load %arg6[%c0_14, %c0_15] : memref<16x32xf32, #tpu.memory_space<vmem>>, vector<16x32xf32>
      tpu.vector_store %arg6[%c0_14, %c0_15], %15 {strides = array<i32>} : memref<16x32xf32, #tpu.memory_space<vmem>>, vector<16x32xf32>,
    } else {
    }
    return
  }
  func.func @transform_0(%arg0: i32, %arg1: i32, %arg2: i32) -> (i32, i32) {
    %c0_i32 = arith.constant 0 : i32
    return %arg0, %arg2 : i32, i32
  }
  func.func @transform_1(%arg0: i32, %arg1: i32, %arg2: i32) -> (i32, i32) {
    %c0_i32 = arith.constant 0 : i32
    return %arg2, %arg1 : i32, i32
  }
  func.func @transform_2(%arg0: i32, %arg1: i32, %arg2: i32) -> (i32, i32) {
    %c0_i32 = arith.constant 0 : i32
    %c0_i32_0 = arith.constant 0 : i32
    return %c0_i32, %arg1 : i32, i32
  }
  func.func @transform_3(%arg0: i32, %arg1: i32, %arg2: i32) -> (i32, i32) {
    %c0_i32 = arith.constant 0 : i32
    return %arg0, %arg1 : i32, i32
  }
}

module attributes {stable_mosaic.version = 11 : i64} {
  func.func @_mm_kernel(%arg0: i32, %arg1: i32, %arg2: i32, %arg3: memref<16x64xbf16, #tpu.memory_space<vmem>>, %arg4: memref<64x32xbf16, #tpu.memory_space<vmem>>, %arg5: memref<1x32xf32, #tpu.memory_space<vmem>>, %arg6: memref<16x32xf32, #tpu.memory_space<vmem>>, %arg7: memref<16x32xf32, #tpu.memory_space<vmem>>) attributes {dimension_semantics = [#tpu.dimension_semantics<parallel>, #tpu.dimension_semantics<parallel>, #tpu.dimension_semantics<arbitrary>], iteration_bounds = array<i64: 1, 1, 1>, scalar_prefetch = 0 : i64, scratch_operands = 1 : i64, tpu.core_type = #tpu.core_type<tc>, window_params = [{transform_indices = @transform_0, window_bounds = array<i64: 16, 64>}, {transform_indices = @transform_1, window_bounds = array<i64: 64, 32>}, {transform_indices = @transform_2, window_bounds = array<i64: 1, 32>}, {transform_indices = @transform_3, window_bounds = array<i64: 16, 32>}]} {
    %c0_i32 = arith.constant 0 : i32
    %0 = arith.cmpi eq, %arg2, %c0_i32 : i32
    %1 = arith.extui %0 : i1 to i32
    %c0_i32_0 = arith.constant 0 : i32
    %2 = arith.cmpi ne, %1, %c0_i32_0 : i32
    scf.if %2 {
      %cst_10 = arith.constant 0.000000e+00 : f32
      %12 = vector.broadcast %cst_10 : f32 to vector<16x32xf32>
      %c0_11 = arith.constant 0 : index
      %c0_12 = arith.constant 0 : index
      %13 = vector.load %arg7[%c0_11, %c0_12] : memref<16x32xf32, #tpu.memory_space<vmem>>, vector<16x32xf32>
      tpu.vector_store %arg7[%c0_11, %c0_12], %12 {strides = array<i32>} : memref<16x32xf32, #tpu.memory_space<vmem>>, vector<16x32xf32>,
    } else {
    }
    %c0 = arith.constant 0 : index
    %c0_1 = arith.constant 0 : index
    %3 = vector.load %arg7[%c0, %c0_1] : memref<16x32xf32, #tpu.memory_space<vmem>>, vector<16x32xf32>
    %c0_2 = arith.constant 0 : index
    %c0_3 = arith.constant 0 : index
    %4 = vector.load %arg3[%c0_2, %c0_3] : memref<16x64xbf16, #tpu.memory_space<vmem>>, vector<16x64xbf16>
    %c0_4 = arith.constant 0 : index
    %c0_5 = arith.constant 0 : index
    %5 = vector.load %arg4[%c0_4, %c0_5] : memref<64x32xbf16, #tpu.memory_space<vmem>>, vector<64x32xbf16>
    %cst = arith.constant dense<0.000000e+00> : vector<16x32xf32>
    %6 = tpu.matmul %4, %5, %cst {dimension_numbers = #tpu.dot_dimension_numbers<[1], [0], [0], [1], [0, 0, 1, 1], [], []>} : vector<16x64xbf16>, vector<64x32xbf16>, vector<16x32xf32> -> vector<16x32xf32>
    %7 = arith.addf %3, %6 : vector<16x32xf32>
    %c0_6 = arith.constant 0 : index
    %c0_7 = arith.constant 0 : index
    %8 = vector.load %arg7[%c0_6, %c0_7] : memref<16x32xf32, #tpu.memory_space<vmem>>, vector<16x32xf32>
    tpu.vector_store %arg7[%c0_6, %c0_7], %7 {strides = array<i32>} : memref<16x32xf32, #tpu.memory_space<vmem>>, vector<16x32xf32>,
    %c0_i32_8 = arith.constant 0 : i32
    %9 = arith.cmpi eq, %arg2, %c0_i32_8 : i32
    %10 = arith.extui %9 : i1 to i32
    %c0_i32_9 = arith.constant 0 : i32
    %11 = arith.cmpi ne, %10, %c0_i32_9 : i32
    scf.if %11 {
      %c0_10 = arith.constant 0 : index
      %c0_11 = arith.constant 0 : index
      %12 = vector.load %arg7[%c0_10, %c0_11] : memref<16x32xf32, #tpu.memory_space<vmem>>, vector<16x32xf32>
      %c0_12 = arith.constant 0 : index
      %c0_13 = arith.constant 0 : index
      %13 = vector.load %arg5[%c0_12, %c0_13] : memref<1x32xf32, #tpu.memory_space<vmem>>, vector<1x32xf32>
      %14 = vector.broadcast %13 : vector<1x32xf32> to vector<16x32xf32>
      %15 = arith.addf %12, %14 : vector<16x32xf32>
      %16 = math.tanh %15 : vector<16x32xf32>
      %c0_14 = arith.constant 0 : index
      %c0_15 = arith.constant 0 : index
      %17 = vector.load %arg6[%c0_14, %c0_15] : memref<16x32xf32, #tpu.memory_space<vmem>>, vector<16x32xf32>
      tpu.vector_store %arg6[%c0_14, %c0_15], %16 {strides = array<i32>} : memref<16x32xf32, #tpu.memory_space<vmem>>, vector<16x32xf32>,
    } else {
    }
    return
  }
  func.func @transform_0(%arg0: i32, %arg1: i32, %arg2: i32) -> (i32, i32) {
    %c0_i32 = arith.constant 0 : i32
    return %arg0, %arg2 : i32, i32
  }
  func.func @transform_1(%arg0: i32, %arg1: i32, %arg2: i32) -> (i32, i32) {
    %c0_i32 = arith.constant 0 : i32
    return %arg2, %arg1 : i32, i32
  }
  func.func @transform_2(%arg0: i32, %arg1: i32, %arg2: i32) -> (i32, i32) {
    %c0_i32 = arith.constant 0 : i32
    %c0_i32_0 = arith.constant 0 : i32
    return %c0_i32, %arg1 : i32, i32
  }
  func.func @transform_3(%arg0: i32, %arg1: i32, %arg2: i32) -> (i32, i32) {
    %c0_i32 = arith.constant 0 : i32
    return %arg0, %arg1 : i32, i32
  }
}

module attributes {stable_mosaic.version = 11 : i64} {
  func.func @_mm_kernel(%arg0: i32, %arg1: i32, %arg2: i32, %arg3: memref<16x32xbf16, #tpu.memory_space<vmem>>, %arg4: memref<32x32xbf16, #tpu.memory_space<vmem>>, %arg5: memref<1x32xf32, #tpu.memory_space<vmem>>, %arg6: memref<16x32xf32, #tpu.memory_space<vmem>>, %arg7: memref<16x32xf32, #tpu.memory_space<vmem>>) attributes {dimension_semantics = [#tpu.dimension_semantics<parallel>, #tpu.dimension_semantics<parallel>, #tpu.dimension_semantics<arbitrary>], iteration_bounds = array<i64: 1, 1, 1>, scalar_prefetch = 0 : i64, scratch_operands = 1 : i64, tpu.core_type = #tpu.core_type<tc>, window_params = [{transform_indices = @transform_0, window_bounds = array<i64: 16, 32>}, {transform_indices = @transform_1, window_bounds = array<i64: 32, 32>}, {transform_indices = @transform_2, window_bounds = array<i64: 1, 32>}, {transform_indices = @transform_3, window_bounds = array<i64: 16, 32>}]} {
    %c0_i32 = arith.constant 0 : i32
    %0 = arith.cmpi eq, %arg2, %c0_i32 : i32
    %1 = arith.extui %0 : i1 to i32
    %c0_i32_0 = arith.constant 0 : i32
    %2 = arith.cmpi ne, %1, %c0_i32_0 : i32
    scf.if %2 {
      %cst_10 = arith.constant 0.000000e+00 : f32
      %12 = vector.broadcast %cst_10 : f32 to vector<16x32xf32>
      %c0_11 = arith.constant 0 : index
      %c0_12 = arith.constant 0 : index
      %13 = vector.load %arg7[%c0_11, %c0_12] : memref<16x32xf32, #tpu.memory_space<vmem>>, vector<16x32xf32>
      tpu.vector_store %arg7[%c0_11, %c0_12], %12 {strides = array<i32>} : memref<16x32xf32, #tpu.memory_space<vmem>>, vector<16x32xf32>,
    } else {
    }
    %c0 = arith.constant 0 : index
    %c0_1 = arith.constant 0 : index
    %3 = vector.load %arg7[%c0, %c0_1] : memref<16x32xf32, #tpu.memory_space<vmem>>, vector<16x32xf32>
    %c0_2 = arith.constant 0 : index
    %c0_3 = arith.constant 0 : index
    %4 = vector.load %arg3[%c0_2, %c0_3] : memref<16x32xbf16, #tpu.memory_space<vmem>>, vector<16x32xbf16>
    %c0_4 = arith.constant 0 : index
    %c0_5 = arith.constant 0 : index
    %5 = vector.load %arg4[%c0_4, %c0_5] : memref<32x32xbf16, #tpu.memory_space<vmem>>, vector<32x32xbf16>
    %cst = arith.constant dense<0.000000e+00> : vector<16x32xf32>
    %6 = tpu.matmul %4, %5, %cst {dimension_numbers = #tpu.dot_dimension_numbers<[1], [0], [0], [1], [0, 0, 1, 1], [], []>} : vector<16x32xbf16>, vector<32x32xbf16>, vector<16x32xf32> -> vector<16x32xf32>
    %7 = arith.addf %3, %6 : vector<16x32xf32>
    %c0_6 = arith.constant 0 : index
    %c0_7 = arith.constant 0 : index
    %8 = vector.load %arg7[%c0_6, %c0_7] : memref<16x32xf32, #tpu.memory_space<vmem>>, vector<16x32xf32>
    tpu.vector_store %arg7[%c0_6, %c0_7], %7 {strides = array<i32>} : memref<16x32xf32, #tpu.memory_space<vmem>>, vector<16x32xf32>,
    %c0_i32_8 = arith.constant 0 : i32
    %9 = arith.cmpi eq, %arg2, %c0_i32_8 : i32
    %10 = arith.extui %9 : i1 to i32
    %c0_i32_9 = arith.constant 0 : i32
    %11 = arith.cmpi ne, %10, %c0_i32_9 : i32
    scf.if %11 {
      %c0_10 = arith.constant 0 : index
      %c0_11 = arith.constant 0 : index
      %12 = vector.load %arg7[%c0_10, %c0_11] : memref<16x32xf32, #tpu.memory_space<vmem>>, vector<16x32xf32>
      %c0_12 = arith.constant 0 : index
      %c0_13 = arith.constant 0 : index
      %13 = vector.load %arg5[%c0_12, %c0_13] : memref<1x32xf32, #tpu.memory_space<vmem>>, vector<1x32xf32>
      %14 = vector.broadcast %13 : vector<1x32xf32> to vector<16x32xf32>
      %15 = arith.addf %12, %14 : vector<16x32xf32>
      %16 = arith.negf %15 : vector<16x32xf32>
      %17 = math.exp %16 : vector<16x32xf32>
      %cst_14 = arith.constant 1.000000e+00 : f32
      %18 = vector.broadcast %cst_14 : f32 to vector<16x32xf32>
      %19 = arith.addf %18, %17 : vector<16x32xf32>
      %20 = arith.divf %18, %19 : vector<16x32xf32>
      %c0_15 = arith.constant 0 : index
      %c0_16 = arith.constant 0 : index
      %21 = vector.load %arg6[%c0_15, %c0_16] : memref<16x32xf32, #tpu.memory_space<vmem>>, vector<16x32xf32>
      tpu.vector_store %arg6[%c0_15, %c0_16], %20 {strides = array<i32>} : memref<16x32xf32, #tpu.memory_space<vmem>>, vector<16x32xf32>,
    } else {
    }
    return
  }
  func.func @transform_0(%arg0: i32, %arg1: i32, %arg2: i32) -> (i32, i32) {
    %c0_i32 = arith.constant 0 : i32
    return %arg0, %arg2 : i32, i32
  }
  func.func @transform_1(%arg0: i32, %arg1: i32, %arg2: i32) -> (i32, i32) {
    %c0_i32 = arith.constant 0 : i32
    return %arg2, %arg1 : i32, i32
  }
  func.func @transform_2(%arg0: i32, %arg1: i32, %arg2: i32) -> (i32, i32) {
    %c0_i32 = arith.constant 0 : i32
    %c0_i32_0 = arith.constant 0 : i32
    return %c0_i32, %arg1 : i32, i32
  }
  func.func @transform_3(%arg0: i32, %arg1: i32, %arg2: i32) -> (i32, i32) {
    %c0_i32 = arith.constant 0 : i32
    return %arg0, %arg1 : i32, i32
  }
}

module attributes {stable_mosaic.version = 11 : i64} {
  func.func @_score_kernel(%arg0: i32, %arg1: memref<2x32xbf16, #tpu.memory_space<vmem>>, %arg2: memref<2x32xbf16, #tpu.memory_space<vmem>>, %arg3: memref<40x32xbf16, #tpu.memory_space<vmem>>, %arg4: memref<2x40xf32, #tpu.memory_space<vmem>>) attributes {dimension_semantics = [#tpu.dimension_semantics<parallel>], iteration_bounds = array<i64: 1>, scalar_prefetch = 0 : i64, scratch_operands = 0 : i64, tpu.core_type = #tpu.core_type<tc>, window_params = [{pipeline_mode = #tpu.pipeline_mode<synchronous>, transform_indices = @transform_0, window_bounds = array<i64: 2, 32>}, {pipeline_mode = #tpu.pipeline_mode<synchronous>, transform_indices = @transform_1, window_bounds = array<i64: 2, 32>}, {transform_indices = @transform_2, window_bounds = array<i64: 40, 32>}, {transform_indices = @transform_3, window_bounds = array<i64: 2, 40>}]} {
    %c0 = arith.constant 0 : index
    %c0_0 = arith.constant 0 : index
    %0 = vector.load %arg1[%c0, %c0_0] : memref<2x32xbf16, #tpu.memory_space<vmem>>, vector<2x32xbf16>
    %c0_1 = arith.constant 0 : index
    %c0_2 = arith.constant 0 : index
    %1 = vector.load %arg3[%c0_1, %c0_2] : memref<40x32xbf16, #tpu.memory_space<vmem>>, vector<40x32xbf16>
    %cst = arith.constant dense<0.000000e+00> : vector<2x40xf32>
    %2 = tpu.matmul %0, %1, %cst {dimension_numbers = #tpu.dot_dimension_numbers<[1], [1], [0], [0], [0, 0, 1, 0], [], []>} : vector<2x32xbf16>, vector<40x32xbf16>, vector<2x40xf32> -> vector<2x40xf32>
    %c0_3 = arith.constant 0 : index
    %c0_4 = arith.constant 0 : index
    %3 = vector.load %arg2[%c0_3, %c0_4] : memref<2x32xbf16, #tpu.memory_space<vmem>>, vector<2x32xbf16>
    %c0_5 = arith.constant 0 : index
    %c0_6 = arith.constant 0 : index
    %4 = vector.load %arg3[%c0_5, %c0_6] : memref<40x32xbf16, #tpu.memory_space<vmem>>, vector<40x32xbf16>
    %cst_7 = arith.constant dense<0.000000e+00> : vector<2x40xf32>
    %5 = tpu.matmul %3, %4, %cst_7 {dimension_numbers = #tpu.dot_dimension_numbers<[1], [1], [0], [0], [0, 0, 1, 0], [], []>} : vector<2x32xbf16>, vector<40x32xbf16>, vector<2x40xf32> -> vector<2x40xf32>
    %cst_8 = arith.constant 0.000000e+00 : f32
    %6 = vector.broadcast %cst_8 : f32 to vector<2x40xf32>
    %7 = arith.cmpf oge, %5, %6 : vector<2x40xf32>
    %cst_9 = arith.constant 0.000000e+00 : f32
    %8 = vector.broadcast %cst_9 : f32 to vector<2x40xf32>
    %9 = arith.mulf %8, %5 : vector<2x40xf32>
    %10 = arith.select %7, %5, %9 : vector<2x40xi1>, vector<2x40xf32>
    %11 = arith.subf %2, %10 : vector<2x40xf32>
    %c0_10 = arith.constant 0 : index
    %c0_11 = arith.constant 0 : index
    %12 = vector.load %arg4[%c0_10, %c0_11] : memref<2x40xf32, #tpu.memory_space<vmem>>, vector<2x40xf32>
    tpu.vector_store %arg4[%c0_10, %c0_11], %11 {strides = array<i32>} : memref<2x40xf32, #tpu.memory_space<vmem>>, vector<2x40xf32>,
    return
  }
  func.func @transform_0(%arg0: i32) -> (i32, i32) {
    %c0_i32 = arith.constant 0 : i32
    %c0_i32_0 = arith.constant 0 : i32
    %c0_i32_1 = arith.constant 0 : i32
    return %c0_i32, %c0_i32_0 : i32, i32
  }
  func.func @transform_1(%arg0: i32) -> (i32, i32) {
    %c0_i32 = arith.constant 0 : i32
    %c0_i32_0 = arith.constant 0 : i32
    %c0_i32_1 = arith.constant 0 : i32
    return %c0_i32, %c0_i32_0 : i32, i32
  }
  func.func @transform_2(%arg0: i32) -> (i32, i32) {
    %c0_i32 = arith.constant 0 : i32
    %c0_i32_0 = arith.constant 0 : i32
    return %arg0, %c0_i32 : i32, i32
  }
  func.func @transform_3(%arg0: i32) -> (i32, i32) {
    %c0_i32 = arith.constant 0 : i32
    %c0_i32_0 = arith.constant 0 : i32
    return %c0_i32, %arg0 : i32, i32
  }
}

</mosaic_0001>

<llo_original>
// kernel: mrgsr_forward.8
$region0: #{mrgsr_forward.8}
  #allocation0 [shape = 'u32[]', space=smem, size = 0x4, offset = 0x4, fixed_abs, tag = 'smem constant byte address 0x4 - core index']
  #allocation1 [shape = 'u32[144,128]{1,0:T(1,128)}', space=vmem, size = 0x12000, scoped, tag = 'internal scratch']
  #allocation2 [shape = 'f32[41,32]{1,0:T(8,128)}', space=vmem, size = 0x6000, scoped, tag = 'scratch operand']
  %s0 = inlined_call_operand.vmem [shape: bf16[4,41,41], index: 0, kind: input, shape index: {}]
  %s1 = inlined_call_operand.vmem [shape: bf16[41,32], index: 1, kind: input, shape index: {}]
  %s2 = inlined_call_operand.vmem [shape: f32[4,41,32], index: 2, kind: output, shape index: {}]
  %s3 = sld [smem:[#allocation0]]
  $region49: #{mrgsr_forward.8} parent=0
    _
  %s5 = ssub.s32 1, %s3
  %s6 = scalar_select 0, %s5, %s3
  loop: start=0, step=1, limit=6
  $region2: #{mrgsr_forward.8} parent=0 // loop_pre_header
    _
  $region3: #{mrgsr_forward.8} parent=0 // loop_header
    %s8 = sphi 0, %s12
    %p9 = scmp.ge.s32.totalorder %s8, 6
    %s15 = sphi 0, %s34
    %s16 = sphi 0, %s30
    %s17 = sphi 0, %s26
    %s18 = sphi 0, %s15
    %s19 = sphi 0, %s16
    %s20 = sphi 0, %s17
    %s21 = sphi 0, %s18
    %s22 = sphi 0, %s19
    %s23 = sphi 0, %s20
    %s41 = sphi 0, %s43
    %s44 = sphi 0, %s41
    %s45 = sphi 0, %s44
    %s61 = sphi 0, %s45
    %s67 = sphi 0, %s69
    %s70 = sphi 0, %s67
    %s71 = sphi 0, %s70
    %s87 = sphi 0, %s71
    %s95 = sphi 0, %s97
    %s98 = sphi 0, %s95
    %s99 = sphi 0, %s98
    %s115 = sphi 0, %s99
  $region4: #{mrgsr_forward.8} parent=0 // loop_header_branch
    %11 = sbr.rel (%p9) target = $region8
  $region5: #{mrgsr_forward.8} parent=0 // loop_body
    %s13 = ssub.s32 %s8, 1
    %s14 = ssub.s32 %s8, 2
    %s24 = sadd.s32 1, %s17
    %p25 = scmp.ge.s32.totalorder %s24, 1
    %s26 = scalar_select %p25, 0, %s24
    %s27 = sadd.s32 1, %s16
    %s28 = scalar_select %p25, %s27, %s16
    %p29 = scmp.ge.s32.totalorder %s28, 1
    %s30 = scalar_select %p29, 0, %s28
    %s31 = sadd.s32 1, %s15
    %s32 = scalar_select %p29, %s31, %s15
    %p33 = scmp.ge.s32.totalorder %s32, 4
    %s34 = scalar_select %p33, 0, %s32
    %s35 = ssub.s32 %s15, %s34
    %s36 = ssub.s32 %s16, %s30
    %s37 = sor.u32 %s35, %s36
    %s38 = ssub.s32 %s17, %s26
    %s39 = sor.u32 %s37, %s38
    %p40 = scmp.eq.s32.totalorder %s39, 0
    %s42 = sadd.s32 %s41, 1
    %s43 = scalar_select %p40, %s41, %s42
    %p46 = pneg %p40
    %p47 = scmp.eq.s32.totalorder %s8, 3
    %p48 = por %p46, %p47
    %p49 = scmp.ne.s32.totalorder %s41, %s44
    %p50 = scmp.eq.s32.totalorder %s8, 0
    %p51 = por %p49, %p50
    %p52 = scmp.ne.s32.totalorder %s41, %s44
    %p53 = scmp.eq.s32.totalorder %s13, 3
    %p54 = por %p52, %p53
    %p55 = scmp.ne.s32.totalorder %s44, %s45
    %p56 = scmp.eq.s32.totalorder %s13, 0
    %p57 = por %p55, %p56
    %p58 = scmp.ne.s32.totalorder %s44, %s45
    %p59 = scmp.eq.s32.totalorder %s14, 3
    %p60 = por %p58, %p59
    %p62 = scmp.ne.s32.totalorder %s45, %s61
    %p63 = scmp.eq.s32.totalorder %s14, 0
    %p64 = por %p62, %p63
    %s65 = ssub.s32 %s17, %s26
    %p66 = scmp.eq.s32.totalorder %s65, 0
    %s68 = sadd.s32 %s67, 1
    %s69 = scalar_select %p66, %s67, %s68
    %p72 = pneg %p66
    %p73 = scmp.eq.s32.totalorder %s8, 3
    %p74 = por %p72, %p73
    %p75 = scmp.ne.s32.totalorder %s67, %s70
    %p76 = scmp.eq.s32.totalorder %s8, 0
    %p77 = por %p75, %p76
    %p78 = scmp.ne.s32.totalorder %s67, %s70
    %p79 = scmp.eq.s32.totalorder %s13, 3
    %p80 = por %p78, %p79
    %p81 = scmp.ne.s32.totalorder %s70, %s71
    %p82 = scmp.eq.s32.totalorder %s13, 0
    %p83 = por %p81, %p82
    %p84 = scmp.ne.s32.totalorder %s70, %s71
    %p85 = scmp.eq.s32.totalorder %s14, 3
    %p86 = por %p84, %p85
    %p88 = scmp.ne.s32.totalorder %s71, %s87
    %p89 = scmp.eq.s32.totalorder %s14, 0
    %p90 = por %p88, %p89
    %s91 = ssub.s32 %s15, %s34
    %s92 = ssub.s32 %s16, %s30
    %s93 = sor.u32 %s91, %s92
    %p94 = scmp.eq.s32.totalorder %s93, 0
    %s96 = sadd.s32 %s95, 1
    %s97 = scalar_select %p94, %s95, %s96
    %p100 = pneg %p94
    %p101 = scmp.eq.s32.totalorder %s8, 3
    %p102 = por %p100, %p101
    %p103 = scmp.ne.s32.totalorder %s95, %s98
    %p104 = scmp.eq.s32.totalorder %s8, 0
    %p105 = por %p103, %p104
    %p106 = scmp.ne.s32.totalorder %s95, %s98
    %p107 = scmp.eq.s32.totalorder %s13, 3
    %p108 = por %p106, %p107
    %p109 = scmp.ne.s32.totalorder %s98, %s99
    %p110 = scmp.eq.s32.totalorder %s13, 0
    %p111 = por %p109, %p110
    %p112 = scmp.ne.s32.totalorder %s98, %s99
    %p113 = scmp.eq.s32.totalorder %s14, 3
    %p114 = por %p112, %p113
    %p116 = scmp.ne.s32.totalorder %s99, %s115
    %p117 = scmp.eq.s32.totalorder %s14, 0
    %p118 = por %p116, %p117
    %p119 = scmp.le.s32.totalorder 1, %s8
    %p120 = scmp.lt.s32.totalorder %s8, 5
    %p121 = pnand %p119, %p120
    %p122 = pneg %p121
    // Predicated region
    $region9: #{mrgsr_forward.8} parent=5 // pred_check
      _
    $region10: #{mrgsr_forward.8} parent=5 // pred_check_branch
      %124 = sbr.rel (%p121) target = $region12
    $region11: #{mrgsr_forward.8} parent=5 // pred_region
      %s125 = ssub.s32 %s8, 1
      // Predicated region
      $region13: #{mrgsr_forward.8} parent=11 // pred_check
        %p126 = pneg %p83
      $region14: #{mrgsr_forward.8} parent=11 // pred_check_branch
        %128 = sbr.rel (%p126) target = $region16
      $region15: #{mrgsr_forward.8} parent=11 // pred_region
        %s129 = smul.u32 6, %s20
        %p130 = scmp.lt.s32.totalorder %s129, 5
        %s131 = scalar_select %p130, %s129, 5
        %s132 = smul.addr %s131, 4
        %s133 = scalar_lea.vmem %s1, %s132
        %s134 = smul.u32 6, %s20
      $region16: #{mrgsr_forward.8} parent=11 // pred_fallthru
        _
    $region12: #{mrgsr_forward.8} parent=5 // pred_fallthru
      _
    %p135 = scmp.lt.s32.totalorder %s8, 4
    // Predicated region
    $region17: #{mrgsr_forward.8} parent=5 // pred_check
      %p136 = pneg %p135
    $region18: #{mrgsr_forward.8} parent=5 // pred_check_branch
      %138 = sbr.rel (%p136) target = $region20
    $region19: #{mrgsr_forward.8} parent=5 // pred_region
      // Predicated region
      $region21: #{mrgsr_forward.8} parent=19 // pred_check
        %p139 = pneg %p51
      $region22: #{mrgsr_forward.8} parent=19 // pred_check_branch
        %141 = sbr.rel (%p139) target = $region24
      $region23: #{mrgsr_forward.8} parent=19 // pred_region
        %s142 = smul.u32 6, %s16
        %p143 = scmp.lt.s32.totalorder %s15, 3
        %s144 = scalar_select %p143, %s15, 3
        %p145 = scmp.lt.s32.totalorder %s142, 5
        %s146 = scalar_select %p145, %s142, 5
        %p147 = scmp.lt.s32.totalorder %s17, 0
        %s148 = scalar_select %p147, %s17, 0
        %s149 = sadd.s32 %s148, %s146
        %s150 = smul.addr %s144, 6
        %s151 = sadd.s32 %s149, %s150
        %s152 = smul.addr %s151, 4
        %s153 = scalar_lea.vmem %s0, %s152
        %s154 = smul.u32 6, %s16
      $region24: #{mrgsr_forward.8} parent=19 // pred_fallthru
        _
    $region20: #{mrgsr_forward.8} parent=5 // pred_fallthru
      _
    %p155 = scmp.le.s32.totalorder 1, %s8
    %p156 = scmp.lt.s32.totalorder %s8, 5
    %p157 = pnand %p155, %p156
    %p158 = pneg %p157
    // Predicated region
    $region25: #{mrgsr_forward.8} parent=5 // pred_check
      _
    $region26: #{mrgsr_forward.8} parent=5 // pred_check_branch
      %160 = sbr.rel (%p157) target = $region28
    $region27: #{mrgsr_forward.8} parent=5 // pred_region
      %s161 = ssub.s32 %s8, 1
      %s162 = smul.u32 6, %s19
      %p163 = scmp.lt.s32.totalorder %s18, 3
      %s164 = scalar_select %p163, %s18, 3
      %p165 = scmp.lt.s32.totalorder %s162, 5
      %s166 = scalar_select %p165, %s162, 5
      %p167 = scmp.lt.s32.totalorder %s20, 0
      %s168 = scalar_select %p167, %s20, 0
      %s169 = sadd.s32 %s168, %s166
      %s170 = smul.addr %s164, 6
      %s171 = sadd.s32 %s169, %s170
      %s172 = smul.addr %s171, 4
      %s173 = scalar_lea.vmem %s0, %s172
      %p174 = pneg %p57
      %p175 = pneg %p54
      %s176 = smul.u32 6, %s20
      %p177 = scmp.lt.s32.totalorder %s176, 5
      %s178 = scalar_select %p177, %s176, 5
      %s179 = smul.addr %s178, 4
      %s180 = scalar_lea.vmem %s1, %s179
      %p181 = pneg %p83
      %p182 = pneg %p80
      %p183 = pneg %p111
      %p184 = pneg %p108
      %s185 = smul.u32 6, %s19
      %p186 = scmp.lt.s32.totalorder %s18, 3
      %s187 = scalar_select %p186, %s18, 3
      %p188 = scmp.lt.s32.totalorder %s185, 5
      %s189 = scalar_select %p188, %s185, 5
      %s190 = smul.addr %s187, 6
      %s191 = sadd.s32 %s189, %s190
      %s192 = smul.addr %s191, 8
      %s193 = scalar_lea.vmem %s2, %s192
      %s194 = smul.u32 6, %s19
      %p195 = scmp.lt.s32.totalorder %s18, 3
      %s196 = scalar_select %p195, %s18, 3
      %p197 = scmp.lt.s32.totalorder %s194, 5
      %s198 = scalar_select %p197, %s194, 5
      %p199 = scmp.lt.s32.totalorder %s20, 0
      %s200 = scalar_select %p199, %s20, 0
      %s201 = sadd.s32 %s200, %s198
      %s202 = smul.addr %s196, 6
      %s203 = sadd.s32 %s201, %s202
      %s204 = smul.addr %s203, 4
      %s205 = scalar_lea.vmem %s0, %s204
      %s206 = smul.u32 6, %s19
      %s207 = smul.u32 6, %s20
      %p208 = scmp.lt.s32.totalorder %s207, 5
      %s209 = scalar_select %p208, %s207, 5
      %s210 = smul.addr %s209, 4
      %s211 = scalar_lea.vmem %s1, %s210
      %s212 = smul.u32 6, %s20
      %s213 = smul.u32 6, %s19
      %p214 = scmp.lt.s32.totalorder %s18, 3
      %s215 = scalar_select %p214, %s18, 3
      %p216 = scmp.lt.s32.totalorder %s213, 5
      %s217 = scalar_select %p216, %s213, 5
      %s218 = smul.addr %s215, 6
      %s219 = sadd.s32 %s217, %s218
      %s220 = smul.addr %s219, 8
      %s221 = scalar_lea.vmem %s2, %s220
      %s222 = smul.u32 6, %s19
      %p224 = scmp.eq.s32.totalorder %s20, 0
      // Predicated region
      $region29: #{mrgsr_forward.8} parent=27 // pred_check
        %p225 = pneg %p224
      $region30: #{mrgsr_forward.8} parent=27 // pred_check_branch
        %227 = sbr.rel (%p225) target = $region32
      $region31: #{mrgsr_forward.8} parent=27 // pred_region
        %vm228 = vcmask 261120
        %229 = vst.msk [vmem:[#allocation2] sm:$0xff] %vm228, 0.0
        %230 = vst.msk [vmem:[#allocation2 + $0x8] sm:$0xff] %vm228, 0.0
        %231 = vst.msk [vmem:[#allocation2 + $0x10] sm:$0xff] %vm228, 0.0
        %232 = vst.msk [vmem:[#allocation2 + $0x18] sm:$0xff] %vm228, 0.0
        %233 = vst.msk [vmem:[#allocation2 + $0x20] sm:$0xff] %vm228, 0.0
        %vm234 = vcmask 253952
        %235 = vst.msk [vmem:[#allocation2 + $0x28] sm:$0x1] %vm234, 0.0
      $region32: #{mrgsr_forward.8} parent=27 // pred_fallthru
        _
      %v236 = vld [vmem:[#allocation2] sm:$0xff]
      %v237 = vld [vmem:[#allocation2 + $0x8] sm:$0xff]
      %v238 = vld [vmem:[#allocation2 + $0x10] sm:$0xff]
      %v239 = vld [vmem:[#allocation2 + $0x18] sm:$0xff]
      %v240 = vld [vmem:[#allocation2 + $0x20] sm:$0xff]
      %v241 = vld [vmem:[#allocation2 + $0x28] sm:$0x1]
      %v242 = vld [vmem:[%s205] sm:$0xf]
      %v243 = vld [vmem:[%s205 + $0x4] sm:$0xf]
      %v244 = vld [vmem:[%s205 + $0x8] sm:$0xf]
      %v245 = vld [vmem:[%s205 + $0xc] sm:$0xf]
      %v246 = vld [vmem:[%s205 + $0x10] sm:$0xf]
      %v247 = vld [vmem:[%s205 + $0x14] sm:$0x1]
      %v248 = vld [vmem:[%s211] sm:$0xf]
      %v249 = vld [vmem:[%s211 + $0x4] sm:$0xf]
      %v250 = vld [vmem:[%s211 + $0x8] sm:$0xf]
      %v251 = vld [vmem:[%s211 + $0xc] sm:$0xf]
      %v252 = vld [vmem:[%s211 + $0x10] sm:$0xf]
      %v253 = vld [vmem:[%s211 + $0x14] sm:$0x1]
      %v260 = vunpack.c.l.b16 %v242
      %v261 = vunpack.c.l.b16 %v243
      %v262 = vunpack.c.l.b16 %v244
      %v263 = vunpack.c.l.b16 %v245
      %v264 = vunpack.c.l.b16 %v246
      %v265 = vunpack.c.l.b16 %v247
      %v266 = vpack.c.b16 %v261, %v260
      %v267 = vpack.c.b16 %v263, %v262
      %v268 = vpack.c.b16 %v265, %v264
      %v275 = vunpack.c.l.b16 %v248
      %v276 = vunpack.c.l.b16 %v249
      %v277 = vunpack.c.l.b16 %v250
      %v278 = vunpack.c.l.b16 %v251
      %v279 = vunpack.c.l.b16 %v252
      %v280 = vunpack.c.l.b16 %v253
      %v281 = vpack.c.b16 %v276, %v275
      %v282 = vpack.c.b16 %v278, %v277
      %v283 = vpack.c.b16 %v280, %v279
      %vm286 = vcmask 334848
      %v288 = vsel %vm286, %v266, 0
      %v291 = vsel %vm286, %v267, 0
      %v294 = vsel %vm286, %v268, 0
      %vm296 = vcmask 1043456
      %vm297 = vcmask 1044480
      %v298 = vsel %vm296, 4294967295, 65535
      %v299 = vsel %vm297, %v298, 0
      %v301 = vand.u32 %v283, %v299
      %303 = vmatprep.subr.bf16.mxu0 0
      %304 = vmatpush1.bf16.msra.mxu0 0
      %305 = vmatprep.subr.bf16.mxu0 0
      %306 = vmatpush1.bf16.msra.mxu0 0
      %307 = vmatprep.subr.bf16.mxu0 0
      %308 = vmatpush1.bf16.msra.mxu0 0
      %309 = vmatprep.subr.bf16.mxu0 0
      %310 = vmatpush1.bf16.msra.mxu0 0
      %311 = vmatprep.subr.bf16.mxu0 0
      %312 = vmatpush1.bf16.msra.mxu0 0
      %313 = vmatprep.subr.bf16.mxu0 0
      %314 = vmatpush1.bf16.msra.mxu0 %v301
      %315 = vmatprep.subr.bf16.mxu0 0
      %316 = vmatpush1.bf16.msra.mxu0 %v282
      %317 = vmatprep.subr.bf16.mxu0 0
      %318 = vmatpush1.bf16.msra.mxu0 %v281
      %319 = vmatprep.subr.bf16.mxu0 0
      %320 = vmatpush2.bf16.msra.mxu0 0
      %321 = vmatprep.subr.bf16.mxu0 0
      %322 = vmatpush2.bf16.msra.mxu0 0
      %323 = vmatprep.subr.bf16.mxu0 0
      %324 = vmatpush2.bf16.msra.mxu0 0
      %325 = vmatprep.subr.bf16.mxu0 0
      %326 = vmatpush2.bf16.msra.mxu0 0
      %327 = vmatprep.subr.bf16.mxu0 0
      %328 = vmatpush2.bf16.msra.mxu0 0
      %329 = vmatprep.subr.bf16.mxu0 0
      %330 = vmatpush2.bf16.msra.mxu0 0
      %331 = vmatprep.subr.bf16.mxu0 0
      %332 = vmatpush2.bf16.msra.mxu0 0
      %333 = vmatprep.subr.bf16.mxu0 0
      %334 = vmatpush2.bf16.msra.mxu0 0
      %335 = vmatprep.mubr.bf16.mxu0 0
      %336 = vmatmul.mubr.bf16.gmra.mxu0 %v288
      %v337 = vpop.f32.mrf.mxu0
      %v338 = vadd.f32 0.0, %v337
      %v339 = vpop.f32.mrf.mxu0
      %v340 = vpop.f32.mrf.mxu0
      %v341 = vadd.f32 0.0, %v340
      %v342 = vpop.f32.mrf.mxu0
      %343 = vmatprep.mubr.bf16.mxu0 0
      %344 = vmatmul.mubr.bf16.gmra.mxu0 %v291
      %v345 = vpop.f32.mrf.mxu0
      %v346 = vadd.f32 0.0, %v345
      %v347 = vpop.f32.mrf.mxu0
      %v348 = vpop.f32.mrf.mxu0
      %v349 = vadd.f32 0.0, %v348
      %v350 = vpop.f32.mrf.mxu0
      %351 = vmatprep.mubr.bf16.mxu0 0
      %352 = vmatmul.mubr.bf16.gmra.mxu0 %v294
      %v353 = vpop.f32.mrf.mxu0
      %v354 = vadd.f32 0.0, %v353
      %v355 = vpop.f32.mrf.mxu0
      %v356 = vpop.f32.mrf.mxu0
      %v357 = vadd.f32 0.0, %v356
      %v358 = vpop.f32.mrf.mxu0
      %359 = vdwg.mxu0
      %v360 = vadd.f32 %v236, %v338
      %v361 = vadd.f32 %v237, %v341
      %v362 = vadd.f32 %v238, %v346
      %v363 = vadd.f32 %v239, %v349
      %v364 = vadd.f32 %v240, %v354
      %v365 = vadd.f32 %v241, %v357
      %vm366 = vcmask 261120
      %367 = vst.msk [vmem:[#allocation2] sm:$0xff] %vm366, %v360
      %368 = vst.msk [vmem:[#allocation2 + $0x8] sm:$0xff] %vm366, %v361
      %369 = vst.msk [vmem:[#allocation2 + $0x10] sm:$0xff] %vm366, %v362
      %370 = vst.msk [vmem:[#allocation2 + $0x18] sm:$0xff] %vm366, %v363
      %371 = vst.msk [vmem:[#allocation2 + $0x20] sm:$0xff] %vm366, %v364
      %vm372 = vcmask 253952
      %373 = vst.msk [vmem:[#allocation2 + $0x28] sm:$0x1] %vm372, %v365
      // Predicated region
      $region33: #{mrgsr_forward.8} parent=27 // pred_check
        %p374 = pneg %p224
      $region34: #{mrgsr_forward.8} parent=27 // pred_check_branch
        %376 = sbr.rel (%p374) target = $region36
      $region35: #{mrgsr_forward.8} parent=27 // pred_region
        %v377 = vld [vmem:[#allocation2] sm:$0xff]
        %v378 = vld [vmem:[#allocation2 + $0x8] sm:$0xff]
        %v379 = vld [vmem:[#allocation2 + $0x10] sm:$0xff]
        %v380 = vld [vmem:[#allocation2 + $0x18] sm:$0xff]
        %v381 = vld [vmem:[#allocation2 + $0x20] sm:$0xff]
        %v382 = vld [vmem:[#allocation2 + $0x28] sm:$0x1]
        %383 = vst.msk [vmem:[%s221] sm:$0xff] %vm366, %v377
        %384 = vst.msk [vmem:[%s221 + $0x8] sm:$0xff] %vm366, %v378
        %385 = vst.msk [vmem:[%s221 + $0x10] sm:$0xff] %vm366, %v379
        %386 = vst.msk [vmem:[%s221 + $0x18] sm:$0xff] %vm366, %v380
        %387 = vst.msk [vmem:[%s221 + $0x20] sm:$0xff] %vm366, %v381
        %388 = vst.msk [vmem:[%s221 + $0x28] sm:$0x1] %vm372, %v382
      $region36: #{mrgsr_forward.8} parent=27 // pred_fallthru
        _
      %s389 = smul.u32 6, %s19
      %p390 = scmp.lt.s32.totalorder %s18, 3
      %s391 = scalar_select %p390, %s18, 3
      %p392 = scmp.lt.s32.totalorder %s389, 5
      %s393 = scalar_select %p392, %s389, 5
      %s394 = smul.addr %s391, 6
      %s395 = sadd.s32 %s393, %s394
      %s396 = smul.addr %s395, 8
      %s397 = scalar_lea.vmem %s2, %s396
      // Predicated region
      $region37: #{mrgsr_forward.8} parent=27 // pred_check
        %p398 = pneg %p108
      $region38: #{mrgsr_forward.8} parent=27 // pred_check_branch
        %400 = sbr.rel (%p398) target = $region40
      $region39: #{mrgsr_forward.8} parent=27 // pred_region
        %s401 = smul.u32 6, %s19
      $region40: #{mrgsr_forward.8} parent=27 // pred_fallthru
        _
    $region28: #{mrgsr_forward.8} parent=5 // pred_fallthru
      _
    %p402 = scmp.le.s32.totalorder 2, %s8
    // Predicated region
    $region41: #{mrgsr_forward.8} parent=5 // pred_check
      %p403 = pneg %p402
    $region42: #{mrgsr_forward.8} parent=5 // pred_check_branch
      %405 = sbr.rel (%p403) target = $region44
    $region43: #{mrgsr_forward.8} parent=5 // pred_region
      %s406 = ssub.s32 %s8, 2
      // Predicated region
      $region45: #{mrgsr_forward.8} parent=43 // pred_check
        %p407 = pneg %p114
      $region46: #{mrgsr_forward.8} parent=43 // pred_check_branch
        %409 = sbr.rel (%p407) target = $region48
      $region47: #{mrgsr_forward.8} parent=43 // pred_region
        %s410 = smul.u32 6, %s22
        %p411 = scmp.lt.s32.totalorder %s21, 3
        %s412 = scalar_select %p411, %s21, 3
        %p413 = scmp.lt.s32.totalorder %s410, 5
        %s414 = scalar_select %p413, %s410, 5
        %s415 = smul.addr %s412, 6
        %s416 = sadd.s32 %s414, %s415
        %s417 = smul.addr %s416, 8
        %s418 = scalar_lea.vmem %s2, %s417
      $region48: #{mrgsr_forward.8} parent=43 // pred_fallthru
        _
    $region44: #{mrgsr_forward.8} parent=5 // pred_fallthru
      _
  $region6: #{mrgsr_forward.8} parent=0 // loop_footer
    %s12 = sadd.s32 1, %s8
  $region7: #{mrgsr_forward.8} parent=0 // loop_footer_branch
    %7 = sbr.rel target = $region3
  $region8: #{mrgsr_forward.8} parent=0 // loop_exit
    _

// kernel: mrgsr_forward.9
$region0: #{mrgsr_forward.9}
  #allocation0 [shape = 'u32[]', space=smem, size = 0x4, offset = 0x4, fixed_abs, tag = 'smem constant byte address 0x4 - core index']
  #allocation1 [shape = 'u32[144,128]{1,0:T(1,128)}', space=vmem, size = 0x12000, scoped, tag = 'internal scratch']
  #allocation2 [shape = 'f32[41,32]{1,0:T(8,128)}', space=vmem, size = 0x6000, scoped, tag = 'scratch operand']
  %s0 = inlined_call_operand.vmem [shape: bf16[41,32], index: 0, kind: input, shape index: {}]
  %s1 = inlined_call_operand.vmem [shape: bf16[32,32], index: 1, kind: input, shape index: {}]
  %s2 = inlined_call_operand.vmem [shape: f32[1,32], index: 2, kind: input, shape index: {}]
  %s3 = inlined_call_operand.vmem [shape: f32[41,32], index: 3, kind: output, shape index: {}]
  %s4 = sld [smem:[#allocation0]]
  $region30: #{mrgsr_forward.9} parent=0
    _
  %s6 = ssub.s32 1, %s4
  %s7 = scalar_select 0, %s6, %s4
  // Predicated region
  $region2: #{mrgsr_forward.9} parent=0 // pred_check
    _
  $region3: #{mrgsr_forward.9} parent=0 // pred_check_branch
    %9 = sbr.rel (0) target = $region5
  $region4: #{mrgsr_forward.9} parent=0 // pred_region
    _
  $region5: #{mrgsr_forward.9} parent=0 // pred_fallthru
    _
  // Predicated region
  $region6: #{mrgsr_forward.9} parent=0 // pred_check
    _
  $region7: #{mrgsr_forward.9} parent=0 // pred_check_branch
    %11 = sbr.rel (0) target = $region9
  $region8: #{mrgsr_forward.9} parent=0 // pred_region
    _
  $region9: #{mrgsr_forward.9} parent=0 // pred_fallthru
    _
  // Predicated region
  $region10: #{mrgsr_forward.9} parent=0 // pred_check
    _
  $region11: #{mrgsr_forward.9} parent=0 // pred_check_branch
    %13 = sbr.rel (0) target = $region13
  $region12: #{mrgsr_forward.9} parent=0 // pred_region
    _
  $region13: #{mrgsr_forward.9} parent=0 // pred_fallthru
    _
  %p15 = scmp.eq.s32.totalorder 0, 0
  // Predicated region
  $region14: #{mrgsr_forward.9} parent=0 // pred_check
    %p16 = pneg %p15
  $region15: #{mrgsr_forward.9} parent=0 // pred_check_branch
    %18 = sbr.rel (%p16) target = $region17
  $region16: #{mrgsr_forward.9} parent=0 // pred_region
    %vm19 = vcmask 261120
    %20 = vst.msk [vmem:[#allocation2] sm:$0xff] %vm19, 0.0
    %21 = vst.msk [vmem:[#allocation2 + $0x8] sm:$0xff] %vm19, 0.0
    %22 = vst.msk [vmem:[#allocation2 + $0x10] sm:$0xff] %vm19, 0.0
    %23 = vst.msk [vmem:[#allocation2 + $0x18] sm:$0xff] %vm19, 0.0
    %24 = vst.msk [vmem:[#allocation2 + $0x20] sm:$0xff] %vm19, 0.0
    %vm25 = vcmask 253952
    %26 = vst.msk [vmem:[#allocation2 + $0x28] sm:$0x1] %vm25, 0.0
  $region17: #{mrgsr_forward.9} parent=0 // pred_fallthru
    _
  %v27 = vld [vmem:[#allocation2] sm:$0xff]
  %v28 = vld [vmem:[#allocation2 + $0x8] sm:$0xff]
  %v29 = vld [vmem:[#allocation2 + $0x10] sm:$0xff]
  %v30 = vld [vmem:[#allocation2 + $0x18] sm:$0xff]
  %v31 = vld [vmem:[#allocation2 + $0x20] sm:$0xff]
  %v32 = vld [vmem:[#allocation2 + $0x28] sm:$0x1]
  %v33 = vld [vmem:[%s0] sm:$0xf]
  %v34 = vld [vmem:[%s0 + $0x4] sm:$0xf]
  %v35 = vld [vmem:[%s0 + $0x8] sm:$0xf]
  %v36 = vld [vmem:[%s0 + $0xc] sm:$0xf]
  %v37 = vld [vmem:[%s0 + $0x10] sm:$0xf]
  %v38 = vld [vmem:[%s0 + $0x14] sm:$0x1]
  %v39 = vld [vmem:[%s1] sm:$0xf]
  %v40 = vld [vmem:[%s1 + $0x4] sm:$0xf]
  %v41 = vld [vmem:[%s1 + $0x8] sm:$0xf]
  %v42 = vld [vmem:[%s1 + $0xc] sm:$0xf]
  %v49 = vunpack.c.l.b16 %v33
  %v50 = vunpack.c.l.b16 %v34
  %v51 = vunpack.c.l.b16 %v35
  %v52 = vunpack.c.l.b16 %v36
  %v53 = vunpack.c.l.b16 %v37
  %v54 = vunpack.c.l.b16 %v38
  %v55 = vpack.c.b16 %v50, %v49
  %v56 = vpack.c.b16 %v52, %v51
  %v57 = vpack.c.b16 %v54, %v53
  %v62 = vunpack.c.l.b16 %v39
  %v63 = vunpack.c.l.b16 %v40
  %v64 = vunpack.c.l.b16 %v41
  %v65 = vunpack.c.l.b16 %v42
  %v66 = vpack.c.b16 %v63, %v62
  %v67 = vpack.c.b16 %v65, %v64
  %vm70 = vcmask 261120
  %v72 = vsel %vm70, %v55, 0
  %v75 = vsel %vm70, %v56, 0
  %v78 = vsel %vm70, %v57, 0
  %80 = vmatprep.subr.bf16.mxu0 0
  %81 = vmatpush1.bf16.msra.mxu0 0
  %82 = vmatprep.subr.bf16.mxu0 0
  %83 = vmatpush1.bf16.msra.mxu0 0
  %84 = vmatprep.subr.bf16.mxu0 0
  %85 = vmatpush1.bf16.msra.mxu0 0
  %86 = vmatprep.subr.bf16.mxu0 0
  %87 = vmatpush1.bf16.msra.mxu0 0
  %88 = vmatprep.subr.bf16.mxu0 0
  %89 = vmatpush1.bf16.msra.mxu0 0
  %90 = vmatprep.subr.bf16.mxu0 0
  %91 = vmatpush1.bf16.msra.mxu0 0
  %92 = vmatprep.subr.bf16.mxu0 0
  %93 = vmatpush1.bf16.msra.mxu0 %v67
  %94 = vmatprep.subr.bf16.mxu0 0
  %95 = vmatpush1.bf16.msra.mxu0 %v66
  %96 = vmatprep.subr.bf16.mxu0 0
  %97 = vmatpush2.bf16.msra.mxu0 0
  %98 = vmatprep.subr.bf16.mxu0 0
  %99 = vmatpush2.bf16.msra.mxu0 0
  %100 = vmatprep.subr.bf16.mxu0 0
  %101 = vmatpush2.bf16.msra.mxu0 0
  %102 = vmatprep.subr.bf16.mxu0 0
  %103 = vmatpush2.bf16.msra.mxu0 0
  %104 = vmatprep.subr.bf16.mxu0 0
  %105 = vmatpush2.bf16.msra.mxu0 0
  %106 = vmatprep.subr.bf16.mxu0 0
  %107 = vmatpush2.bf16.msra.mxu0 0
  %108 = vmatprep.subr.bf16.mxu0 0
  %109 = vmatpush2.bf16.msra.mxu0 0
  %110 = vmatprep.subr.bf16.mxu0 0
  %111 = vmatpush2.bf16.msra.mxu0 0
  %112 = vmatprep.mubr.bf16.mxu0 0
  %113 = vmatmul.mubr.bf16.gmra.mxu0 %v72
  %v114 = vpop.f32.mrf.mxu0
  %v115 = vadd.f32 0.0, %v114
  %v116 = vpop.f32.mrf.mxu0
  %v117 = vpop.f32.mrf.mxu0
  %v118 = vadd.f32 0.0, %v117
  %v119 = vpop.f32.mrf.mxu0
  %120 = vmatprep.mubr.bf16.mxu0 0
  %121 = vmatmul.mubr.bf16.gmra.mxu0 %v75
  %v122 = vpop.f32.mrf.mxu0
  %v123 = vadd.f32 0.0, %v122
  %v124 = vpop.f32.mrf.mxu0
  %v125 = vpop.f32.mrf.mxu0
  %v126 = vadd.f32 0.0, %v125
  %v127 = vpop.f32.mrf.mxu0
  %128 = vmatprep.mubr.bf16.mxu0 0
  %129 = vmatmul.mubr.bf16.gmra.mxu0 %v78
  %v130 = vpop.f32.mrf.mxu0
  %v131 = vadd.f32 0.0, %v130
  %v132 = vpop.f32.mrf.mxu0
  %v133 = vpop.f32.mrf.mxu0
  %v134 = vadd.f32 0.0, %v133
  %v135 = vpop.f32.mrf.mxu0
  %136 = vdwg.mxu0
  %v137 = vadd.f32 %v27, %v115
  %v138 = vadd.f32 %v28, %v118
  %v139 = vadd.f32 %v29, %v123
  %v140 = vadd.f32 %v30, %v126
  %v141 = vadd.f32 %v31, %v131
  %v142 = vadd.f32 %v32, %v134
  %143 = vst.msk [vmem:[#allocation2] sm:$0xff] %vm70, %v137
  %144 = vst.msk [vmem:[#allocation2 + $0x8] sm:$0xff] %vm70, %v138
  %145 = vst.msk [vmem:[#allocation2 + $0x10] sm:$0xff] %vm70, %v139
  %146 = vst.msk [vmem:[#allocation2 + $0x18] sm:$0xff] %vm70, %v140
  %147 = vst.msk [vmem:[#allocation2 + $0x20] sm:$0xff] %vm70, %v141
  %vm148 = vcmask 253952
  %149 = vst.msk [vmem:[#allocation2 + $0x28] sm:$0x1] %vm148, %v142
  // Predicated region
  $region18: #{mrgsr_forward.9} parent=0 // pred_check
    %p150 = pneg %p15
  $region19: #{mrgsr_forward.9} parent=0 // pred_check_branch
    %152 = sbr.rel (%p150) target = $region21
  $region20: #{mrgsr_forward.9} parent=0 // pred_region
    %v153 = vld [vmem:[#allocation2] sm:$0xff]
    %v154 = vld [vmem:[#allocation2 + $0x8] sm:$0xff]
    %v155 = vld [vmem:[#allocation2 + $0x10] sm:$0xff]
    %v156 = vld [vmem:[#allocation2 + $0x18] sm:$0xff]
    %v157 = vld [vmem:[#allocation2 + $0x20] sm:$0xff]
    %v158 = vld [vmem:[#allocation2 + $0x28] sm:$0x1]
    %v159 = vld [vmem:[%s2] sm:$0x1]
    %v161 = vlaneseq
    %v162 = vshrl.u32 %v161, 7
    %v163 = vsub.s32 0, %v162
    %v164 = vrot.slane %v159, %v163
    %v166 = vadd.f32 %v153, %v164
    %v167 = vadd.f32 %v154, %v164
    %v168 = vadd.f32 %v155, %v164
    %v169 = vadd.f32 %v156, %v164
    %v170 = vadd.f32 %v157, %v164
    %v171 = vadd.f32 %v158, %v164
    %v172 = vmax.f32 %v166, 0.0
    %v173 = vmax.f32 %v167, 0.0
    %v174 = vmax.f32 %v168, 0.0
    %v175 = vmax.f32 %v169, 0.0
    %v176 = vmax.f32 %v170, 0.0
    %v177 = vmax.f32 %v171, 0.0
    %178 = vst.msk [vmem:[%s3] sm:$0xff] %vm70, %v172
    %179 = vst.msk [vmem:[%s3 + $0x8] sm:$0xff] %vm70, %v173
    %180 = vst.msk [vmem:[%s3 + $0x10] sm:$0xff] %vm70, %v174
    %181 = vst.msk [vmem:[%s3 + $0x18] sm:$0xff] %vm70, %v175
    %182 = vst.msk [vmem:[%s3 + $0x20] sm:$0xff] %vm70, %v176
    %183 = vst.msk [vmem:[%s3 + $0x28] sm:$0x1] %vm148, %v177
  $region21: #{mrgsr_forward.9} parent=0 // pred_fallthru
    _
  // Predicated region
  $region22: #{mrgsr_forward.9} parent=0 // pred_check
    _
  $region23: #{mrgsr_forward.9} parent=0 // pred_check_branch
    %185 = sbr.rel (0) target = $region25
  $region24: #{mrgsr_forward.9} parent=0 // pred_region
    _
  $region25: #{mrgsr_forward.9} parent=0 // pred_fallthru
    _
  // Predicated region
  $region26: #{mrgsr_forward.9} parent=0 // pred_check
    _
  $region27: #{mrgsr_forward.9} parent=0 // pred_check_branch
    %187 = sbr.rel (0) target = $region29
  $region28: #{mrgsr_forward.9} parent=0 // pred_region
    _
  $region29: #{mrgsr_forward.9} parent=0 // pred_fallthru
    _

// kernel: mrgsr_forward.11
$region0: #{mrgsr_forward.11}
  #allocation0 [shape = 'u32[]', space=smem, size = 0x4, offset = 0x4, fixed_abs, tag = 'smem constant byte address 0x4 - core index']
  #allocation1 [shape = 'u32[144,128]{1,0:T(1,128)}', space=vmem, size = 0x12000, scoped, tag = 'internal scratch']
  %s0 = inlined_call_operand.vmem [shape: f32[16,32], index: 0, kind: input, shape index: {}]
  %s1 = inlined_call_operand.vmem [shape: f32[16,32], index: 1, kind: input, shape index: {}]
  %s2 = inlined_call_operand.vmem [shape: f32[16,32], index: 2, kind: input, shape index: {}]
  %s3 = inlined_call_operand.vmem [shape: f32[1,32], index: 3, kind: input, shape index: {}]
  %s4 = inlined_call_operand.vmem [shape: f32[1,32], index: 4, kind: input, shape index: {}]
  %s5 = inlined_call_operand.vmem [shape: f32[1,32], index: 5, kind: input, shape index: {}]
  %s6 = inlined_call_operand.vmem [shape: f32[16,32], index: 6, kind: output, shape index: {0}]
  %s7 = inlined_call_operand.vmem [shape: f32[16,32], index: 7, kind: output, shape index: {1}]
  %8 = xla_tuple %s6, %s7
  %s9 = sld [smem:[#allocation0]]
  $region42: #{mrgsr_forward.11} parent=0
    _
  %s11 = ssub.s32 1, %s9
  %s12 = scalar_select 0, %s11, %s9
  // Predicated region
  $region2: #{mrgsr_forward.11} parent=0 // pred_check
    _
  $region3: #{mrgsr_forward.11} parent=0 // pred_check_branch
    %14 = sbr.rel (0) target = $region5
  $region4: #{mrgsr_forward.11} parent=0 // pred_region
    _
  $region5: #{mrgsr_forward.11} parent=0 // pred_fallthru
    _
  // Predicated region
  $region6: #{mrgsr_forward.11} parent=0 // pred_check
    _
  $region7: #{mrgsr_forward.11} parent=0 // pred_check_branch
    %16 = sbr.rel (0) target = $region9
  $region8: #{mrgsr_forward.11} parent=0 // pred_region
    _
  $region9: #{mrgsr_forward.11} parent=0 // pred_fallthru
    _
  // Predicated region
  $region10: #{mrgsr_forward.11} parent=0 // pred_check
    _
  $region11: #{mrgsr_forward.11} parent=0 // pred_check_branch
    %18 = sbr.rel (0) target = $region13
  $region12: #{mrgsr_forward.11} parent=0 // pred_region
    _
  $region13: #{mrgsr_forward.11} parent=0 // pred_fallthru
    _
  // Predicated region
  $region14: #{mrgsr_forward.11} parent=0 // pred_check
    _
  $region15: #{mrgsr_forward.11} parent=0 // pred_check_branch
    %20 = sbr.rel (0) target = $region17
  $region16: #{mrgsr_forward.11} parent=0 // pred_region
    _
  $region17: #{mrgsr_forward.11} parent=0 // pred_fallthru
    _
  // Predicated region
  $region18: #{mrgsr_forward.11} parent=0 // pred_check
    _
  $region19: #{mrgsr_forward.11} parent=0 // pred_check_branch
    %22 = sbr.rel (0) target = $region21
  $region20: #{mrgsr_forward.11} parent=0 // pred_region
    _
  $region21: #{mrgsr_forward.11} parent=0 // pred_fallthru
    _
  // Predicated region
  $region22: #{mrgsr_forward.11} parent=0 // pred_check
    _
  $region23: #{mrgsr_forward.11} parent=0 // pred_check_branch
    %24 = sbr.rel (0) target = $region25
  $region24: #{mrgsr_forward.11} parent=0 // pred_region
    _
  $region25: #{mrgsr_forward.11} parent=0 // pred_fallthru
    _
  %v25 = vld [vmem:[%s0] sm:$0xff]
  %v26 = vld [vmem:[%s0 + $0x8] sm:$0xff]
  %v27 = vld [vmem:[%s1] sm:$0xff]
  %v28 = vld [vmem:[%s1 + $0x8] sm:$0xff]
  %v29 = vld [vmem:[%s2] sm:$0xff]
  %v30 = vld [vmem:[%s2 + $0x8] sm:$0xff]
  %v31 = vld [vmem:[%s5] sm:$0x1]
  %v33 = vlaneseq
  %v34 = vshrl.u32 %v33, 7
  %v35 = vsub.s32 0, %v34
  %v36 = vrot.slane %v31, %v35
  %v38 = vmul.f32 %v29, %v36
  %v39 = vmul.f32 %v30, %v36
  %vm40 = vcmask 261120
  %v41 = vsel %vm40, %v38, 0.0
  %42 = vadd.xlane.f32.xlu0 %v41
  %v43 = vpop.xlane.xlu0 %42
  %v44 = vsel %vm40, %v39, 0.0
  %45 = vadd.xlane.f32.xlu0 %v44
  %v46 = vpop.xlane.xlu0 %45
  %v47 = vld [vmem:[%s3] sm:$0x1]
  %v49 = vlaneseq
  %v50 = vshrl.u32 %v49, 7
  %v51 = vsub.s32 0, %v50
  %v52 = vrot.slane %v47, %v51
  %v54 = vmul.f32 %v25, %v52
  %v55 = vmul.f32 %v26, %v52
  %v56 = vsel %vm40, %v54, 0.0
  %57 = vadd.xlane.f32.xlu0 %v56
  %v58 = vpop.xlane.xlu0 %57
  %v59 = vsel %vm40, %v55, 0.0
  %60 = vadd.xlane.f32.xlu0 %v59
  %v61 = vpop.xlane.xlu0 %60
  %v62 = vadd.f32 %v58, %v43
  %v63 = vadd.f32 %v61, %v46
  %v64 = vxor.u32 %v62, 2147483648
  %v65 = vxor.u32 %v63, 2147483648
  %v66 = vmul.f32 %v64, 1.442695
  %v67 = vpow.pop %v66
  %v68 = vmul.f32 %v65, 1.442695
  %v69 = vpow.pop %v68
  %v70 = vadd.f32 %v67, 1.0
  %v71 = vadd.f32 %v69, 1.0
  %v72 = vrcp.pop %v70
  %v73 = vmul.f32 1.0, %v72
  %v74 = vrcp.pop %v71
  %v75 = vmul.f32 1.0, %v74
  %v76 = vld [vmem:[%s4] sm:$0x1]
  %v78 = vlaneseq
  %v79 = vshrl.u32 %v78, 7
  %v80 = vsub.s32 0, %v79
  %v81 = vrot.slane %v76, %v80
  %v83 = vmul.f32 %v27, %v81
  %v84 = vmul.f32 %v28, %v81
  %v85 = vsel %vm40, %v83, 0.0
  %86 = vadd.xlane.f32.xlu0 %v85
  %v87 = vpop.xlane.xlu0 %86
  %v88 = vsel %vm40, %v84, 0.0
  %89 = vadd.xlane.f32.xlu0 %v88
  %v90 = vpop.xlane.xlu0 %89
  %v91 = vadd.f32 %v87, %v43
  %v92 = vadd.f32 %v90, %v46
  %v93 = vxor.u32 %v91, 2147483648
  %v94 = vxor.u32 %v92, 2147483648
  %v95 = vmul.f32 %v93, 1.442695
  %v96 = vpow.pop %v95
  %v97 = vmul.f32 %v94, 1.442695
  %v98 = vpow.pop %v97
  %v99 = vadd.f32 %v96, 1.0
  %v100 = vadd.f32 %v98, 1.0
  %v101 = vrcp.pop %v99
  %v102 = vmul.f32 1.0, %v101
  %v103 = vrcp.pop %v100
  %v104 = vmul.f32 1.0, %v103
  %v105 = vmul.f32 %v73, %v25
  %v106 = vmul.f32 %v75, %v26
  %v107 = vsub.f32 1.0, %v73
  %v108 = vsub.f32 1.0, %v75
  %v109 = vmul.f32 %v107, %v29
  %v110 = vmul.f32 %v108, %v30
  %v111 = vadd.f32 %v105, %v109
  %v112 = vadd.f32 %v106, %v110
  %113 = vst.msk [vmem:[%s6] sm:$0xff] %vm40, %v111
  %114 = vst.msk [vmem:[%s6 + $0x8] sm:$0xff] %vm40, %v112
  %v115 = vmul.f32 %v102, %v27
  %v116 = vmul.f32 %v104, %v28
  %v117 = vsub.f32 1.0, %v102
  %v118 = vsub.f32 1.0, %v104
  %v119 = vmul.f32 %v117, %v29
  %v120 = vmul.f32 %v118, %v30
  %v121 = vadd.f32 %v115, %v119
  %v122 = vadd.f32 %v116, %v120
  %123 = vst.msk [vmem:[%s7] sm:$0xff] %vm40, %v121
  %124 = vst.msk [vmem:[%s7 + $0x8] sm:$0xff] %vm40, %v122
  // Predicated region
  $region26: #{mrgsr_forward.11} parent=0 // pred_check
    _
  $region27: #{mrgsr_forward.11} parent=0 // pred_check_branch
    %126 = sbr.rel (0) target = $region29
  $region28: #{mrgsr_forward.11} parent=0 // pred_region
    _
  $region29: #{mrgsr_forward.11} parent=0 // pred_fallthru
    _
  // Predicated region
  $region30: #{mrgsr_forward.11} parent=0 // pred_check
    _
  $region31: #{mrgsr_forward.11} parent=0 // pred_check_branch
    %128 = sbr.rel (0) target = $region33
  $region32: #{mrgsr_forward.11} parent=0 // pred_region
    _
  $region33: #{mrgsr_forward.11} parent=0 // pred_fallthru
    _
  // Predicated region
  $region34: #{mrgsr_forward.11} parent=0 // pred_check
    _
  $region35: #{mrgsr_forward.11} parent=0 // pred_check_branch
    %130 = sbr.rel (0) target = $region37
  $region36: #{mrgsr_forward.11} parent=0 // pred_region
    _
  $region37: #{mrgsr_forward.11} parent=0 // pred_fallthru
    _
  // Predicated region
  $region38: #{mrgsr_forward.11} parent=0 // pred_check
    _
  $region39: #{mrgsr_forward.11} parent=0 // pred_check_branch
    %132 = sbr.rel (0) target = $region41
  $region40: #{mrgsr_forward.11} parent=0 // pred_region
    _
  $region41: #{mrgsr_forward.11} parent=0 // pred_fallthru
    _

// kernel: mrgsr_forward.14
$region0: #{mrgsr_forward.14}
  #allocation0 [shape = 'u32[]', space=smem, size = 0x4, offset = 0x4, fixed_abs, tag = 'smem constant byte address 0x4 - core index']
  #allocation1 [shape = 'u32[144,128]{1,0:T(1,128)}', space=vmem, size = 0x12000, scoped, tag = 'internal scratch']
  #allocation2 [shape = 'f32[16,32]{1,0:T(8,128)}', space=vmem, size = 0x2000, scoped, tag = 'scratch operand']
  %s0 = inlined_call_operand.vmem [shape: bf16[16,32], index: 0, kind: input, shape index: {}]
  %s1 = inlined_call_operand.vmem [shape: bf16[32,32], index: 1, kind: input, shape index: {}]
  %s2 = inlined_call_operand.vmem [shape: f32[1,32], index: 2, kind: input, shape index: {}]
  %s3 = inlined_call_operand.vmem [shape: f32[16,32], index: 3, kind: output, shape index: {}]
  %s4 = sld [smem:[#allocation0]]
  $region30: #{mrgsr_forward.14} parent=0
    _
  %s6 = ssub.s32 1, %s4
  %s7 = scalar_select 0, %s6, %s4
  // Predicated region
  $region2: #{mrgsr_forward.14} parent=0 // pred_check
    _
  $region3: #{mrgsr_forward.14} parent=0 // pred_check_branch
    %9 = sbr.rel (0) target = $region5
  $region4: #{mrgsr_forward.14} parent=0 // pred_region
    _
  $region5: #{mrgsr_forward.14} parent=0 // pred_fallthru
    _
  // Predicated region
  $region6: #{mrgsr_forward.14} parent=0 // pred_check
    _
  $region7: #{mrgsr_forward.14} parent=0 // pred_check_branch
    %11 = sbr.rel (0) target = $region9
  $region8: #{mrgsr_forward.14} parent=0 // pred_region
    _
  $region9: #{mrgsr_forward.14} parent=0 // pred_fallthru
    _
  // Predicated region
  $region10: #{mrgsr_forward.14} parent=0 // pred_check
    _
  $region11: #{mrgsr_forward.14} parent=0 // pred_check_branch
    %13 = sbr.rel (0) target = $region13
  $region12: #{mrgsr_forward.14} parent=0 // pred_region
    _
  $region13: #{mrgsr_forward.14} parent=0 // pred_fallthru
    _
  %p15 = scmp.eq.s32.totalorder 0, 0
  // Predicated region
  $region14: #{mrgsr_forward.14} parent=0 // pred_check
    %p16 = pneg %p15
  $region15: #{mrgsr_forward.14} parent=0 // pred_check_branch
    %18 = sbr.rel (%p16) target = $region17
  $region16: #{mrgsr_forward.14} parent=0 // pred_region
    %vm19 = vcmask 261120
    %20 = vst.msk [vmem:[#allocation2] sm:$0xff] %vm19, 0.0
    %21 = vst.msk [vmem:[#allocation2 + $0x8] sm:$0xff] %vm19, 0.0
  $region17: #{mrgsr_forward.14} parent=0 // pred_fallthru
    _
  %v22 = vld [vmem:[#allocation2] sm:$0xff]
  %v23 = vld [vmem:[#allocation2 + $0x8] sm:$0xff]
  %v24 = vld [vmem:[%s0] sm:$0xf]
  %v25 = vld [vmem:[%s0 + $0x4] sm:$0xf]
  %v26 = vld [vmem:[%s1] sm:$0xf]
  %v27 = vld [vmem:[%s1 + $0x4] sm:$0xf]
  %v28 = vld [vmem:[%s1 + $0x8] sm:$0xf]
  %v29 = vld [vmem:[%s1 + $0xc] sm:$0xf]
  %v32 = vunpack.c.l.b16 %v24
  %v33 = vunpack.c.l.b16 %v25
  %v34 = vpack.c.b16 %v33, %v32
  %v39 = vunpack.c.l.b16 %v26
  %v40 = vunpack.c.l.b16 %v27
  %v41 = vunpack.c.l.b16 %v28
  %v42 = vunpack.c.l.b16 %v29
  %v43 = vpack.c.b16 %v40, %v39
  %v44 = vpack.c.b16 %v42, %v41
  %vm47 = vcmask 261120
  %v49 = vsel %vm47, %v34, 0
  %51 = vmatprep.subr.bf16.mxu0 0
  %52 = vmatpush1.bf16.msra.mxu0 0
  %53 = vmatprep.subr.bf16.mxu0 0
  %54 = vmatpush1.bf16.msra.mxu0 0
  %55 = vmatprep.subr.bf16.mxu0 0
  %56 = vmatpush1.bf16.msra.mxu0 0
  %57 = vmatprep.subr.bf16.mxu0 0
  %58 = vmatpush1.bf16.msra.mxu0 0
  %59 = vmatprep.subr.bf16.mxu0 0
  %60 = vmatpush1.bf16.msra.mxu0 0
  %61 = vmatprep.subr.bf16.mxu0 0
  %62 = vmatpush1.bf16.msra.mxu0 0
  %63 = vmatprep.subr.bf16.mxu0 0
  %64 = vmatpush1.bf16.msra.mxu0 %v44
  %65 = vmatprep.subr.bf16.mxu0 0
  %66 = vmatpush1.bf16.msra.mxu0 %v43
  %67 = vmatprep.subr.bf16.mxu0 0
  %68 = vmatpush2.bf16.msra.mxu0 0
  %69 = vmatprep.subr.bf16.mxu0 0
  %70 = vmatpush2.bf16.msra.mxu0 0
  %71 = vmatprep.subr.bf16.mxu0 0
  %72 = vmatpush2.bf16.msra.mxu0 0
  %73 = vmatprep.subr.bf16.mxu0 0
  %74 = vmatpush2.bf16.msra.mxu0 0
  %75 = vmatprep.subr.bf16.mxu0 0
  %76 = vmatpush2.bf16.msra.mxu0 0
  %77 = vmatprep.subr.bf16.mxu0 0
  %78 = vmatpush2.bf16.msra.mxu0 0
  %79 = vmatprep.subr.bf16.mxu0 0
  %80 = vmatpush2.bf16.msra.mxu0 0
  %81 = vmatprep.subr.bf16.mxu0 0
  %82 = vmatpush2.bf16.msra.mxu0 0
  %83 = vmatprep.mubr.bf16.mxu0 0
  %84 = vmatmul.mubr.bf16.gmra.mxu0 %v49
  %v85 = vpop.f32.mrf.mxu0
  %v86 = vadd.f32 0.0, %v85
  %v87 = vpop.f32.mrf.mxu0
  %v88 = vpop.f32.mrf.mxu0
  %v89 = vadd.f32 0.0, %v88
  %v90 = vpop.f32.mrf.mxu0
  %91 = vdwg.mxu0
  %v92 = vadd.f32 %v22, %v86
  %v93 = vadd.f32 %v23, %v89
  %94 = vst.msk [vmem:[#allocation2] sm:$0xff] %vm47, %v92
  %95 = vst.msk [vmem:[#allocation2 + $0x8] sm:$0xff] %vm47, %v93
  // Predicated region
  $region18: #{mrgsr_forward.14} parent=0 // pred_check
    %p96 = pneg %p15
  $region19: #{mrgsr_forward.14} parent=0 // pred_check_branch
    %98 = sbr.rel (%p96) target = $region21
  $region20: #{mrgsr_forward.14} parent=0 // pred_region
    %v99 = vld [vmem:[#allocation2] sm:$0xff]
    %v100 = vld [vmem:[#allocation2 + $0x8] sm:$0xff]
    %v101 = vld [vmem:[%s2] sm:$0x1]
    %v103 = vlaneseq
    %v104 = vshrl.u32 %v103, 7
    %v105 = vsub.s32 0, %v104
    %v106 = vrot.slane %v101, %v105
    %v108 = vadd.f32 %v99, %v106
    %v109 = vadd.f32 %v100, %v106
    %110 = vst.msk [vmem:[%s3] sm:$0xff] %vm47, %v108
    %111 = vst.msk [vmem:[%s3 + $0x8] sm:$0xff] %vm47, %v109
  $region21: #{mrgsr_forward.14} parent=0 // pred_fallthru
    _
  // Predicated region
  $region22: #{mrgsr_forward.14} parent=0 // pred_check
    _
  $region23: #{mrgsr_forward.14} parent=0 // pred_check_branch
    %113 = sbr.rel (0) target = $region25
  $region24: #{mrgsr_forward.14} parent=0 // pred_region
    _
  $region25: #{mrgsr_forward.14} parent=0 // pred_fallthru
    _
  // Predicated region
  $region26: #{mrgsr_forward.14} parent=0 // pred_check
    _
  $region27: #{mrgsr_forward.14} parent=0 // pred_check_branch
    %115 = sbr.rel (0) target = $region29
  $region28: #{mrgsr_forward.14} parent=0 // pred_region
    _
  $region29: #{mrgsr_forward.14} parent=0 // pred_fallthru
    _

// kernel: mrgsr_forward.12
$region0: #{mrgsr_forward.12}
  #allocation0 [shape = 'u32[]', space=smem, size = 0x4, offset = 0x4, fixed_abs, tag = 'smem constant byte address 0x4 - core index']
  #allocation1 [shape = 'u32[144,128]{1,0:T(1,128)}', space=vmem, size = 0x12000, scoped, tag = 'internal scratch']
  #allocation2 [shape = 'f32[16,32]{1,0:T(8,128)}', space=vmem, size = 0x2000, scoped, tag = 'scratch operand']
  %s0 = inlined_call_operand.vmem [shape: bf16[16,64], index: 0, kind: input, shape index: {}]
  %s1 = inlined_call_operand.vmem [shape: bf16[64,32], index: 1, kind: input, shape index: {}]
  %s2 = inlined_call_operand.vmem [shape: f32[1,32], index: 2, kind: input, shape index: {}]
  %s3 = inlined_call_operand.vmem [shape: f32[16,32], index: 3, kind: output, shape index: {}]
  %s4 = sld [smem:[#allocation0]]
  $region30: #{mrgsr_forward.12} parent=0
    _
  %s6 = ssub.s32 1, %s4
  %s7 = scalar_select 0, %s6, %s4
  // Predicated region
  $region2: #{mrgsr_forward.12} parent=0 // pred_check
    _
  $region3: #{mrgsr_forward.12} parent=0 // pred_check_branch
    %9 = sbr.rel (0) target = $region5
  $region4: #{mrgsr_forward.12} parent=0 // pred_region
    _
  $region5: #{mrgsr_forward.12} parent=0 // pred_fallthru
    _
  // Predicated region
  $region6: #{mrgsr_forward.12} parent=0 // pred_check
    _
  $region7: #{mrgsr_forward.12} parent=0 // pred_check_branch
    %11 = sbr.rel (0) target = $region9
  $region8: #{mrgsr_forward.12} parent=0 // pred_region
    _
  $region9: #{mrgsr_forward.12} parent=0 // pred_fallthru
    _
  // Predicated region
  $region10: #{mrgsr_forward.12} parent=0 // pred_check
    _
  $region11: #{mrgsr_forward.12} parent=0 // pred_check_branch
    %13 = sbr.rel (0) target = $region13
  $region12: #{mrgsr_forward.12} parent=0 // pred_region
    _
  $region13: #{mrgsr_forward.12} parent=0 // pred_fallthru
    _
  %p15 = scmp.eq.s32.totalorder 0, 0
  // Predicated region
  $region14: #{mrgsr_forward.12} parent=0 // pred_check
    %p16 = pneg %p15
  $region15: #{mrgsr_forward.12} parent=0 // pred_check_branch
    %18 = sbr.rel (%p16) target = $region17
  $region16: #{mrgsr_forward.12} parent=0 // pred_region
    %vm19 = vcmask 261120
    %20 = vst.msk [vmem:[#allocation2] sm:$0xff] %vm19, 0.0
    %21 = vst.msk [vmem:[#allocation2 + $0x8] sm:$0xff] %vm19, 0.0
  $region17: #{mrgsr_forward.12} parent=0 // pred_fallthru
    _
  %v22 = vld [vmem:[#allocation2] sm:$0xff]
  %v23 = vld [vmem:[#allocation2 + $0x8] sm:$0xff]
  %v24 = vld [vmem:[%s0] sm:$0xf]
  %v25 = vld [vmem:[%s0 + $0x4] sm:$0xf]
  %v26 = vld [vmem:[%s1] sm:$0xf]
  %v27 = vld [vmem:[%s1 + $0x4] sm:$0xf]
  %v28 = vld [vmem:[%s1 + $0x8] sm:$0xf]
  %v29 = vld [vmem:[%s1 + $0xc] sm:$0xf]
  %v30 = vld [vmem:[%s1 + $0x10] sm:$0xf]
  %v31 = vld [vmem:[%s1 + $0x14] sm:$0xf]
  %v32 = vld [vmem:[%s1 + $0x18] sm:$0xf]
  %v33 = vld [vmem:[%s1 + $0x1c] sm:$0xf]
  %v36 = vunpack.c.l.b16 %v24
  %v37 = vunpack.c.l.b16 %v25
  %v38 = vpack.c.b16 %v37, %v36
  %v47 = vunpack.c.l.b16 %v26
  %v48 = vunpack.c.l.b16 %v27
  %v49 = vunpack.c.l.b16 %v28
  %v50 = vunpack.c.l.b16 %v29
  %v51 = vunpack.c.l.b16 %v30
  %v52 = vunpack.c.l.b16 %v31
  %v53 = vunpack.c.l.b16 %v32
  %v54 = vunpack.c.l.b16 %v33
  %v55 = vpack.c.b16 %v48, %v47
  %v56 = vpack.c.b16 %v50, %v49
  %v57 = vpack.c.b16 %v52, %v51
  %v58 = vpack.c.b16 %v54, %v53
  %vm63 = vcmask 523264
  %v65 = vsel %vm63, %v38, 0
  %67 = vmatprep.subr.bf16.mxu0 0
  %68 = vmatpush1.bf16.msra.mxu0 0
  %69 = vmatprep.subr.bf16.mxu0 0
  %70 = vmatpush1.bf16.msra.mxu0 0
  %71 = vmatprep.subr.bf16.mxu0 0
  %72 = vmatpush1.bf16.msra.mxu0 0
  %73 = vmatprep.subr.bf16.mxu0 0
  %74 = vmatpush1.bf16.msra.mxu0 0
  %75 = vmatprep.subr.bf16.mxu0 0
  %76 = vmatpush1.bf16.msra.mxu0 %v58
  %77 = vmatprep.subr.bf16.mxu0 0
  %78 = vmatpush1.bf16.msra.mxu0 %v57
  %79 = vmatprep.subr.bf16.mxu0 0
  %80 = vmatpush1.bf16.msra.mxu0 %v56
  %81 = vmatprep.subr.bf16.mxu0 0
  %82 = vmatpush1.bf16.msra.mxu0 %v55
  %83 = vmatprep.subr.bf16.mxu0 0
  %84 = vmatpush2.bf16.msra.mxu0 0
  %85 = vmatprep.subr.bf16.mxu0 0
  %86 = vmatpush2.bf16.msra.mxu0 0
  %87 = vmatprep.subr.bf16.mxu0 0
  %88 = vmatpush2.bf16.msra.mxu0 0
  %89 = vmatprep.subr.bf16.mxu0 0
  %90 = vmatpush2.bf16.msra.mxu0 0
  %91 = vmatprep.subr.bf16.mxu0 0
  %92 = vmatpush2.bf16.msra.mxu0 0
  %93 = vmatprep.subr.bf16.mxu0 0
  %94 = vmatpush2.bf16.msra.mxu0 0
  %95 = vmatprep.subr.bf16.mxu0 0
  %96 = vmatpush2.bf16.msra.mxu0 0
  %97 = vmatprep.subr.bf16.mxu0 0
  %98 = vmatpush2.bf16.msra.mxu0 0
  %99 = vmatprep.mubr.bf16.mxu0 0
  %100 = vmatmul.mubr.bf16.gmra.mxu0 %v65
  %v101 = vpop.f32.mrf.mxu0
  %v102 = vadd.f32 0.0, %v101
  %v103 = vpop.f32.mrf.mxu0
  %v104 = vpop.f32.mrf.mxu0
  %v105 = vadd.f32 0.0, %v104
  %v106 = vpop.f32.mrf.mxu0
  %107 = vdwg.mxu0
  %v108 = vadd.f32 %v22, %v102
  %v109 = vadd.f32 %v23, %v105
  %vm110 = vcmask 261120
  %111 = vst.msk [vmem:[#allocation2] sm:$0xff] %vm110, %v108
  %112 = vst.msk [vmem:[#allocation2 + $0x8] sm:$0xff] %vm110, %v109
  // Predicated region
  $region18: #{mrgsr_forward.12} parent=0 // pred_check
    %p113 = pneg %p15
  $region19: #{mrgsr_forward.12} parent=0 // pred_check_branch
    %115 = sbr.rel (%p113) target = $region21
  $region20: #{mrgsr_forward.12} parent=0 // pred_region
    %v116 = vld [vmem:[#allocation2] sm:$0xff]
    %v117 = vld [vmem:[#allocation2 + $0x8] sm:$0xff]
    %v118 = vld [vmem:[%s2] sm:$0x1]
    %v120 = vlaneseq
    %v121 = vshrl.u32 %v120, 7
    %v122 = vsub.s32 0, %v121
    %v123 = vrot.slane %v118, %v122
    %v125 = vadd.f32 %v116, %v123
    %v126 = vadd.f32 %v117, %v123
    %v127 = vtanh.pop %v125
    %v128 = vtanh.pop %v126
    %129 = vst.msk [vmem:[%s3] sm:$0xff] %vm110, %v127
    %130 = vst.msk [vmem:[%s3 + $0x8] sm:$0xff] %vm110, %v128
  $region21: #{mrgsr_forward.12} parent=0 // pred_fallthru
    _
  // Predicated region
  $region22: #{mrgsr_forward.12} parent=0 // pred_check
    _
  $region23: #{mrgsr_forward.12} parent=0 // pred_check_branch
    %132 = sbr.rel (0) target = $region25
  $region24: #{mrgsr_forward.12} parent=0 // pred_region
    _
  $region25: #{mrgsr_forward.12} parent=0 // pred_fallthru
    _
  // Predicated region
  $region26: #{mrgsr_forward.12} parent=0 // pred_check
    _
  $region27: #{mrgsr_forward.12} parent=0 // pred_check_branch
    %134 = sbr.rel (0) target = $region29
  $region28: #{mrgsr_forward.12} parent=0 // pred_region
    _
  $region29: #{mrgsr_forward.12} parent=0 // pred_fallthru
    _

// kernel: mrgsr_forward.13
$region0: #{mrgsr_forward.13}
  #allocation0 [shape = 'u32[]', space=smem, size = 0x4, offset = 0x4, fixed_abs, tag = 'smem constant byte address 0x4 - core index']
  #allocation1 [shape = 'u32[144,128]{1,0:T(1,128)}', space=vmem, size = 0x12000, scoped, tag = 'internal scratch']
  #allocation2 [shape = 'f32[16,32]{1,0:T(8,128)}', space=vmem, size = 0x2000, scoped, tag = 'scratch operand']
  %s0 = inlined_call_operand.vmem [shape: bf16[16,32], index: 0, kind: input, shape index: {}]
  %s1 = inlined_call_operand.vmem [shape: bf16[32,32], index: 1, kind: input, shape index: {}]
  %s2 = inlined_call_operand.vmem [shape: f32[1,32], index: 2, kind: input, shape index: {}]
  %s3 = inlined_call_operand.vmem [shape: f32[16,32], index: 3, kind: output, shape index: {}]
  %s4 = sld [smem:[#allocation0]]
  $region30: #{mrgsr_forward.13} parent=0
    _
  %s6 = ssub.s32 1, %s4
  %s7 = scalar_select 0, %s6, %s4
  // Predicated region
  $region2: #{mrgsr_forward.13} parent=0 // pred_check
    _
  $region3: #{mrgsr_forward.13} parent=0 // pred_check_branch
    %9 = sbr.rel (0) target = $region5
  $region4: #{mrgsr_forward.13} parent=0 // pred_region
    _
  $region5: #{mrgsr_forward.13} parent=0 // pred_fallthru
    _
  // Predicated region
  $region6: #{mrgsr_forward.13} parent=0 // pred_check
    _
  $region7: #{mrgsr_forward.13} parent=0 // pred_check_branch
    %11 = sbr.rel (0) target = $region9
  $region8: #{mrgsr_forward.13} parent=0 // pred_region
    _
  $region9: #{mrgsr_forward.13} parent=0 // pred_fallthru
    _
  // Predicated region
  $region10: #{mrgsr_forward.13} parent=0 // pred_check
    _
  $region11: #{mrgsr_forward.13} parent=0 // pred_check_branch
    %13 = sbr.rel (0) target = $region13
  $region12: #{mrgsr_forward.13} parent=0 // pred_region
    _
  $region13: #{mrgsr_forward.13} parent=0 // pred_fallthru
    _
  %p15 = scmp.eq.s32.totalorder 0, 0
  // Predicated region
  $region14: #{mrgsr_forward.13} parent=0 // pred_check
    %p16 = pneg %p15
  $region15: #{mrgsr_forward.13} parent=0 // pred_check_branch
    %18 = sbr.rel (%p16) target = $region17
  $region16: #{mrgsr_forward.13} parent=0 // pred_region
    %vm19 = vcmask 261120
    %20 = vst.msk [vmem:[#allocation2] sm:$0xff] %vm19, 0.0
    %21 = vst.msk [vmem:[#allocation2 + $0x8] sm:$0xff] %vm19, 0.0
  $region17: #{mrgsr_forward.13} parent=0 // pred_fallthru
    _
  %v22 = vld [vmem:[#allocation2] sm:$0xff]
  %v23 = vld [vmem:[#allocation2 + $0x8] sm:$0xff]
  %v24 = vld [vmem:[%s0] sm:$0xf]
  %v25 = vld [vmem:[%s0 + $0x4] sm:$0xf]
  %v26 = vld [vmem:[%s1] sm:$0xf]
  %v27 = vld [vmem:[%s1 + $0x4] sm:$0xf]
  %v28 = vld [vmem:[%s1 + $0x8] sm:$0xf]
  %v29 = vld [vmem:[%s1 + $0xc] sm:$0xf]
  %v32 = vunpack.c.l.b16 %v24
  %v33 = vunpack.c.l.b16 %v25
  %v34 = vpack.c.b16 %v33, %v32
  %v39 = vunpack.c.l.b16 %v26
  %v40 = vunpack.c.l.b16 %v27
  %v41 = vunpack.c.l.b16 %v28
  %v42 = vunpack.c.l.b16 %v29
  %v43 = vpack.c.b16 %v40, %v39
  %v44 = vpack.c.b16 %v42, %v41
  %vm47 = vcmask 261120
  %v49 = vsel %vm47, %v34, 0
  %51 = vmatprep.subr.bf16.mxu0 0
  %52 = vmatpush1.bf16.msra.mxu0 0
  %53 = vmatprep.subr.bf16.mxu0 0
  %54 = vmatpush1.bf16.msra.mxu0 0
  %55 = vmatprep.subr.bf16.mxu0 0
  %56 = vmatpush1.bf16.msra.mxu0 0
  %57 = vmatprep.subr.bf16.mxu0 0
  %58 = vmatpush1.bf16.msra.mxu0 0
  %59 = vmatprep.subr.bf16.mxu0 0
  %60 = vmatpush1.bf16.msra.mxu0 0
  %61 = vmatprep.subr.bf16.mxu0 0
  %62 = vmatpush1.bf16.msra.mxu0 0
  %63 = vmatprep.subr.bf16.mxu0 0
  %64 = vmatpush1.bf16.msra.mxu0 %v44
  %65 = vmatprep.subr.bf16.mxu0 0
  %66 = vmatpush1.bf16.msra.mxu0 %v43
  %67 = vmatprep.subr.bf16.mxu0 0
  %68 = vmatpush2.bf16.msra.mxu0 0
  %69 = vmatprep.subr.bf16.mxu0 0
  %70 = vmatpush2.bf16.msra.mxu0 0
  %71 = vmatprep.subr.bf16.mxu0 0
  %72 = vmatpush2.bf16.msra.mxu0 0
  %73 = vmatprep.subr.bf16.mxu0 0
  %74 = vmatpush2.bf16.msra.mxu0 0
  %75 = vmatprep.subr.bf16.mxu0 0
  %76 = vmatpush2.bf16.msra.mxu0 0
  %77 = vmatprep.subr.bf16.mxu0 0
  %78 = vmatpush2.bf16.msra.mxu0 0
  %79 = vmatprep.subr.bf16.mxu0 0
  %80 = vmatpush2.bf16.msra.mxu0 0
  %81 = vmatprep.subr.bf16.mxu0 0
  %82 = vmatpush2.bf16.msra.mxu0 0
  %83 = vmatprep.mubr.bf16.mxu0 0
  %84 = vmatmul.mubr.bf16.gmra.mxu0 %v49
  %v85 = vpop.f32.mrf.mxu0
  %v86 = vadd.f32 0.0, %v85
  %v87 = vpop.f32.mrf.mxu0
  %v88 = vpop.f32.mrf.mxu0
  %v89 = vadd.f32 0.0, %v88
  %v90 = vpop.f32.mrf.mxu0
  %91 = vdwg.mxu0
  %v92 = vadd.f32 %v22, %v86
  %v93 = vadd.f32 %v23, %v89
  %94 = vst.msk [vmem:[#allocation2] sm:$0xff] %vm47, %v92
  %95 = vst.msk [vmem:[#allocation2 + $0x8] sm:$0xff] %vm47, %v93
  // Predicated region
  $region18: #{mrgsr_forward.13} parent=0 // pred_check
    %p96 = pneg %p15
  $region19: #{mrgsr_forward.13} parent=0 // pred_check_branch
    %98 = sbr.rel (%p96) target = $region21
  $region20: #{mrgsr_forward.13} parent=0 // pred_region
    %v99 = vld [vmem:[#allocation2] sm:$0xff]
    %v100 = vld [vmem:[#allocation2 + $0x8] sm:$0xff]
    %v101 = vld [vmem:[%s2] sm:$0x1]
    %v103 = vlaneseq
    %v104 = vshrl.u32 %v103, 7
    %v105 = vsub.s32 0, %v104
    %v106 = vrot.slane %v101, %v105
    %v108 = vadd.f32 %v99, %v106
    %v109 = vadd.f32 %v100, %v106
    %v110 = vxor.u32 %v108, 2147483648
    %v111 = vxor.u32 %v109, 2147483648
    %v112 = vmul.f32 %v110, 1.442695
    %v113 = vpow.pop %v112
    %v114 = vmul.f32 %v111, 1.442695
    %v115 = vpow.pop %v114
    %v116 = vadd.f32 %v113, 1.0
    %v117 = vadd.f32 %v115, 1.0
    %v118 = vrcp.pop %v116
    %v119 = vmul.f32 1.0, %v118
    %v120 = vrcp.pop %v117
    %v121 = vmul.f32 1.0, %v120
    %122 = vst.msk [vmem:[%s3] sm:$0xff] %vm47, %v119
    %123 = vst.msk [vmem:[%s3 + $0x8] sm:$0xff] %vm47, %v121
  $region21: #{mrgsr_forward.13} parent=0 // pred_fallthru
    _
  // Predicated region
  $region22: #{mrgsr_forward.13} parent=0 // pred_check
    _
  $region23: #{mrgsr_forward.13} parent=0 // pred_check_branch
    %125 = sbr.rel (0) target = $region25
  $region24: #{mrgsr_forward.13} parent=0 // pred_region
    _
  $region25: #{mrgsr_forward.13} parent=0 // pred_fallthru
    _
  // Predicated region
  $region26: #{mrgsr_forward.13} parent=0 // pred_check
    _
  $region27: #{mrgsr_forward.13} parent=0 // pred_check_branch
    %127 = sbr.rel (0) target = $region29
  $region28: #{mrgsr_forward.13} parent=0 // pred_region
    _
  $region29: #{mrgsr_forward.13} parent=0 // pred_fallthru
    _

// kernel: mrgsr_forward.15
$region0: #{mrgsr_forward.15}
  #allocation0 [shape = 'u32[]', space=smem, size = 0x4, offset = 0x4, fixed_abs, tag = 'smem constant byte address 0x4 - core index']
  #allocation1 [shape = 'u32[144,128]{1,0:T(1,128)}', space=vmem, size = 0x12000, scoped, tag = 'internal scratch']
  %s0 = inlined_call_operand.vmem [shape: bf16[2,32], index: 0, kind: input, shape index: {}]
  %s1 = inlined_call_operand.vmem [shape: bf16[2,32], index: 1, kind: input, shape index: {}]
  %s2 = inlined_call_operand.vmem [shape: bf16[40,32], index: 2, kind: input, shape index: {}]
  %s3 = inlined_call_operand.hbm [shape: f32[2,40], index: 3, kind: output, shape index: {}]
  %s4 = sld [smem:[#allocation0]]
  $region22: #{mrgsr_forward.15} parent=0
    _
  %s6 = ssub.s32 1, %s4
  %s7 = scalar_select 0, %s6, %s4
  $region1: #{mrgsr_forward.15} parent=0
    #allocation2 [shape = 'u8[1024]{0}', space=vmem, size = 0x400, scoped, tag = 'output window, operand 0, single buffered']
    #allocation3 [shape = 's32[1]{0}', space=sflag, size = 0x4, scoped, tag = 'scoped memory for mrgsr_forward.15']
    %8 = vsyncpa [#allocation3], 0
    // Predicated region
    $region2: #{mrgsr_forward.15} parent=1 // pred_check
      _
    $region3: #{mrgsr_forward.15} parent=1 // pred_check_branch
      %10 = sbr.rel (0) target = $region5
    $region4: #{mrgsr_forward.15} parent=1 // pred_region
      _
    $region5: #{mrgsr_forward.15} parent=1 // pred_fallthru
      _
    // Predicated region
    $region6: #{mrgsr_forward.15} parent=1 // pred_check
      _
    $region7: #{mrgsr_forward.15} parent=1 // pred_check_branch
      %12 = sbr.rel (0) target = $region9
    $region8: #{mrgsr_forward.15} parent=1 // pred_region
      _
    $region9: #{mrgsr_forward.15} parent=1 // pred_fallthru
      _
    // Predicated region
    $region10: #{mrgsr_forward.15} parent=1 // pred_check
      _
    $region11: #{mrgsr_forward.15} parent=1 // pred_check_branch
      %14 = sbr.rel (0) target = $region13
    $region12: #{mrgsr_forward.15} parent=1 // pred_region
      _
    $region13: #{mrgsr_forward.15} parent=1 // pred_fallthru
      _
    %v16 = vld [vmem:[%s0] sm:$0x1]
    %v17 = vld [vmem:[%s2] sm:$0xf]
    %v18 = vld [vmem:[%s2 + $0x4] sm:$0xf]
    %v19 = vld [vmem:[%s2 + $0x8] sm:$0xf]
    %v20 = vld [vmem:[%s2 + $0xc] sm:$0xf]
    %v21 = vld [vmem:[%s2 + $0x10] sm:$0xf]
    %v27 = vunpack.c.l.b16 %v17
    %v28 = vunpack.c.l.b16 %v18
    %v29 = vunpack.c.l.b16 %v19
    %v30 = vunpack.c.l.b16 %v20
    %v31 = vunpack.c.l.b16 %v21
    %v32 = vpack.c.b16 %v28, %v27
    %v33 = vpack.c.b16 %v30, %v29
    %v34 = vpack.c.b16 %v31, %v31
    %vm35 = vcmask 261120
    %v37 = vsel %vm35, %v16, 0
    %v40 = vsel %vm35, %v32, 0
    %v43 = vsel %vm35, %v33, 0
    %v46 = vsel %vm35, %v34, 0
    %48 = vmatprep.subr.bf16.mxu0 0
    %49 = vmatpush1.bf16.xpose.msra.mxu0 0
    %50 = vmatprep.subr.bf16.mxu0 0
    %51 = vmatpush1.bf16.xpose.msra.mxu0 0
    %52 = vmatprep.subr.bf16.mxu0 0
    %53 = vmatpush1.bf16.xpose.msra.mxu0 0
    %54 = vmatprep.subr.bf16.mxu0 0
    %55 = vmatpush1.bf16.xpose.msra.mxu0 0
    %56 = vmatprep.subr.bf16.mxu0 0
    %57 = vmatpush1.bf16.xpose.msra.mxu0 0
    %58 = vmatprep.subr.bf16.mxu0 0
    %59 = vmatpush1.bf16.xpose.msra.mxu0 %v46
    %60 = vmatprep.subr.bf16.mxu0 0
    %61 = vmatpush1.bf16.xpose.msra.mxu0 %v43
    %62 = vmatprep.subr.bf16.mxu0 0
    %63 = vmatpush1.bf16.xpose.msra.mxu0 %v40
    %64 = vmatprep.subr.bf16.mxu0 0
    %65 = vmatpush2.bf16.xpose.msra.mxu0 0
    %66 = vmatprep.subr.bf16.mxu0 0
    %67 = vmatpush2.bf16.xpose.msra.mxu0 0
    %68 = vmatprep.subr.bf16.mxu0 0
    %69 = vmatpush2.bf16.xpose.msra.mxu0 0
    %70 = vmatprep.subr.bf16.mxu0 0
    %71 = vmatpush2.bf16.xpose.msra.mxu0 0
    %72 = vmatprep.subr.bf16.mxu0 0
    %73 = vmatpush2.bf16.xpose.msra.mxu0 0
    %74 = vmatprep.subr.bf16.mxu0 0
    %75 = vmatpush2.bf16.xpose.msra.mxu0 0
    %76 = vmatprep.subr.bf16.mxu0 0
    %77 = vmatpush2.bf16.xpose.msra.mxu0 0
    %78 = vmatprep.subr.bf16.mxu0 0
    %79 = vmatpush2.bf16.xpose.msra.mxu0 0
    %80 = vmatprep.mubr.bf16.mxu0 0
    %81 = vmatmul.mubr.bf16.gmra.mxu0 %v37
    %v82 = vpop.f32.mrf.mxu0
    %v83 = vadd.f32 0.0, %v82
    %v84 = vpop.f32.mrf.mxu0
    %v85 = vpop.f32.mrf.mxu0
    %v86 = vpop.f32.mrf.mxu0
    %87 = vdwg.mxu0
    %v88 = vld [vmem:[%s1] sm:$0x1]
    %v90 = vsel %vm35, %v88, 0
    %92 = vmatprep.subr.bf16.mxu0 0
    %93 = vmatpush1.bf16.xpose.msra.mxu0 0
    %94 = vmatprep.subr.bf16.mxu0 0
    %95 = vmatpush1.bf16.xpose.msra.mxu0 0
    %96 = vmatprep.subr.bf16.mxu0 0
    %97 = vmatpush1.bf16.xpose.msra.mxu0 0
    %98 = vmatprep.subr.bf16.mxu0 0
    %99 = vmatpush1.bf16.xpose.msra.mxu0 0
    %100 = vmatprep.subr.bf16.mxu0 0
    %101 = vmatpush1.bf16.xpose.msra.mxu0 0
    %102 = vmatprep.subr.bf16.mxu0 0
    %103 = vmatpush1.bf16.xpose.msra.mxu0 %v46
    %104 = vmatprep.subr.bf16.mxu0 0
    %105 = vmatpush1.bf16.xpose.msra.mxu0 %v43
    %106 = vmatprep.subr.bf16.mxu0 0
    %107 = vmatpush1.bf16.xpose.msra.mxu0 %v40
    %108 = vmatprep.subr.bf16.mxu0 0
    %109 = vmatpush2.bf16.xpose.msra.mxu0 0
    %110 = vmatprep.subr.bf16.mxu0 0
    %111 = vmatpush2.bf16.xpose.msra.mxu0 0
    %112 = vmatprep.subr.bf16.mxu0 0
    %113 = vmatpush2.bf16.xpose.msra.mxu0 0
    %114 = vmatprep.subr.bf16.mxu0 0
    %115 = vmatpush2.bf16.xpose.msra.mxu0 0
    %116 = vmatprep.subr.bf16.mxu0 0
    %117 = vmatpush2.bf16.xpose.msra.mxu0 0
    %118 = vmatprep.subr.bf16.mxu0 0
    %119 = vmatpush2.bf16.xpose.msra.mxu0 0
    %120 = vmatprep.subr.bf16.mxu0 0
    %121 = vmatpush2.bf16.xpose.msra.mxu0 0
    %122 = vmatprep.subr.bf16.mxu0 0
    %123 = vmatpush2.bf16.xpose.msra.mxu0 0
    %124 = vmatprep.mubr.bf16.mxu0 0
    %125 = vmatmul.mubr.bf16.gmra.mxu0 %v90
    %v126 = vpop.f32.mrf.mxu0
    %v127 = vadd.f32 0.0, %v126
    %v128 = vpop.f32.mrf.mxu0
    %v129 = vpop.f32.mrf.mxu0
    %v130 = vpop.f32.mrf.mxu0
    %131 = vdwg.mxu0
    %vm132 = vcmp.ge.f32.partialorder %v127, 0.0
    %v133 = vmul.f32 %v127, 0.0
    %v134 = vsel %vm132, %v127, %v133
    %v135 = vsub.f32 %v83, %v134
    %vm136 = vcmask 320512
    %137 = vst.msk [vmem:[#allocation2] sm:$0x3] %vm136, %v135
    // Predicated region
    $region14: #{mrgsr_forward.15} parent=1 // pred_check
      _
    $region15: #{mrgsr_forward.15} parent=1 // pred_check_branch
      %139 = sbr.rel (0) target = $region17
    $region16: #{mrgsr_forward.15} parent=1 // pred_region
      %s141 = ssub.s32 32, 32
      %142 = vsyncadd [#allocation3], %s141
      %s144 = sshll.u32 [#allocation2], 4
      %s145 = int_to_ptr.vmem [resolvable:$true] %s144
      %147 = dma.vmem_to_hbm [thread:$0]  %s145, 32, %s3, [#allocation3]
    $region17: #{mrgsr_forward.15} parent=1 // pred_fallthru
      _
    // Predicated region
    $region18: #{mrgsr_forward.15} parent=1 // pred_check
      _
    $region19: #{mrgsr_forward.15} parent=1 // pred_check_branch
      %149 = sbr.rel (0) target = $region21
    $region20: #{mrgsr_forward.15} parent=1 // pred_region
      %150 = dma.done [#allocation3], 32
    $region21: #{mrgsr_forward.15} parent=1 // pred_fallthru
      _
    %151 = vsyncpa [#allocation3], 1

</llo_original>
